<compile_context>
chip_gen: v6e
topology: v6e:2x2x1
jax: 0.10.0
libtpu: 0.0.40
codegen_flags: <defaults>
</compile_context>

<pallas_src>
import functools
import math

import jax
import jax.numpy as jnp
from jax import lax
from jax.experimental import pallas as pl
from jax.experimental.pallas import tpu as pltpu

LANE = 128  # TPU lane width; fc output is padded to this for lane-dense stores.


def _layer_norm(x, g, b):
    mu = jnp.mean(x, axis=-1, keepdims=True)
    var = jnp.mean(jnp.square(x - mu), axis=-1, keepdims=True)
    return (x - mu) * lax.rsqrt(var + 1e-5) * g + b


# ----------------------------------------------------------------------------
# Fused BeatNet kernel.  grid = (num_b_tiles,): one grid step processes a whole
# [b_tile, S, T, F] slab; the source loop is a static unroll inside the body.
# ----------------------------------------------------------------------------
def beatnet_kernel(x_ref, w_ref, ln_ref, fcw_ref, fcb_ref,
                   logits_ref, scores_ref, *, src_weights):
    TB, S, T, F = x_ref.shape
    R = TB * T
    scale = 1.0 / math.sqrt(F)

    x_all = x_ref[...].astype(jnp.float32)      # [TB, S, T, F]
    w_all = w_ref[...]                          # [S, 6, F, F] bf16 (resident)
    ln_all = ln_ref[...]                        # [S, 4, F] f32  (resident)

    acc_y = jnp.zeros((R, F), jnp.float32)
    acc_logits = jnp.zeros((R, F), jnp.float32)

    for s in range(S):                          # static unroll (S is tiny)
        x2 = x_all[:, s].reshape(R, F)          # leading-dim reshape (view)
        x2b = x2.astype(jnp.bfloat16)

        wq, wk, wv = w_all[s, 0], w_all[s, 1], w_all[s, 2]
        w1, w2, wf = w_all[s, 3], w_all[s, 4], w_all[s, 5]
        g1, b1 = ln_all[s, 0:1], ln_all[s, 1:2]
        g2, b2 = ln_all[s, 2:3], ln_all[s, 3:4]

        # --- single-head attention (separate lane-dense Q/K/V matmuls) -------
        q = jnp.dot(x2b, wq, preferred_element_type=jnp.float32)       # [R, F]
        k = jnp.dot(x2b, wk, preferred_element_type=jnp.float32)
        v = jnp.dot(x2b, wv, preferred_element_type=jnp.float32)

        q3 = (q * scale).astype(jnp.bfloat16).reshape(TB, T, F)
        k3 = k.astype(jnp.bfloat16).reshape(TB, T, F)
        v3 = v.astype(jnp.bfloat16).reshape(TB, T, F)

        att = jnp.einsum('btf,bsf->bts', q3, k3,
                         preferred_element_type=jnp.float32)           # [TB,T,T]
        att = att - jnp.max(att, axis=-1, keepdims=True)
        p = jnp.exp(att)
        p = p * pl.reciprocal(jnp.sum(p, axis=-1, keepdims=True), approx=True)
        h = jnp.einsum('bts,bsf->btf', p.astype(jnp.bfloat16), v3,
                       preferred_element_type=jnp.float32)             # [TB,T,F]

        # --- residual + LN + FFN + LN ----------------------------------------
        x1 = _layer_norm(x2 + h.reshape(R, F), g1, b1)                 # [R, F]
        x1b = x1.astype(jnp.bfloat16)
        ffn = jnp.maximum(
            jnp.dot(x1b, w1, preferred_element_type=jnp.float32), 0.0)
        ffn = jnp.dot(ffn.astype(jnp.bfloat16), w2,
                      preferred_element_type=jnp.float32)
        out = _layer_norm(x1 + ffn, g2, b2)                            # [R, F]

        # per-source projection ("logits" branch of BaseTransformer)
        f = jnp.dot(out.astype(jnp.bfloat16), wf,
                    preferred_element_type=jnp.float32)                # [R, F]

        # --- per-source weighting, summed over sources ------------------------
        w_s = float(src_weights[s])             # static constant (no SMEM read)
        acc_y = acc_y + w_s * out
        acc_logits = acc_logits + w_s * f

    logits_ref[...] = acc_logits.reshape(TB, T, F)

    # dropout is identity in eval mode; fc over the lane-padded weight.
    # argmax over classes happens in the JAX wrapper (lane-dense bf16 slab here).
    scores = jnp.dot(acc_y.astype(jnp.bfloat16), fcw_ref[...],
                     preferred_element_type=jnp.float32) + fcb_ref[...]
    scores_ref[...] = scores.reshape(TB, T, -1).astype(scores_ref.dtype)


def _pick_b_tile(B, S, T, F, c_pad, budget_bytes=6 * 1024 * 1024):
    """Largest divisor of B whose per-step footprint stays within `budget_bytes`.

    Includes the double-buffered x block, ~10 [T,F] f32 intermediates, the
    T^2 attention scores, and the double-buffered logits/scores output blocks.
    Also keeps nb = B/b_tile >= 2 whenever B >= 2 so both v7x TensorCores get
    work (on single-TC v5e/v6e this costs at most one extra ~0.35us grid step).
    """
    per_b = (2 * S * T * F * 4          # x block, double-buffered
             + 10 * T * F * 4           # q,k,v,h,x1,ffn,out,f,acc_y,acc_logits
             + 2 * T * T * 4            # att / p
             + 2 * (T * F * 4 + T * c_pad * 2))   # logits + bf16 scores, x2 buf
    cap = max(1, budget_bytes // per_b)
    if B >= 2:
        cap = min(cap, B // 2)          # megacore: keep >= 2 parallel grid steps
    bt = max(1, min(B, cap))
    while B % bt != 0:
        bt -= 1
    return bt


def beatnet_forward(x, params, *, b_tile=None):
    """x: [B, S, T, F] -> (beats [B, T] int32, logits [B, T, F] float32)."""
    B, S, T, F = x.shape
    C_pad = params["fc_w_pad"].shape[-1]
    n_class = params["n_class"]
    src_weights = params["src_weights"]
    if b_tile is None:
        b_tile = _pick_b_tile(B, S, T, F, C_pad)
    nb = B // b_tile

    kernel = functools.partial(beatnet_kernel, src_weights=src_weights)

    grid_spec = pltpu.PrefetchScalarGridSpec(
        num_scalar_prefetch=0,
        grid=(nb,),
        in_specs=[
            pl.BlockSpec((b_tile, S, T, F), lambda b: (b, 0, 0, 0)),   # x slab
            pl.BlockSpec((S, 6, F, F), lambda b: (0, 0, 0, 0)),        # wq..wf
            pl.BlockSpec((S, 4, F), lambda b: (0, 0, 0)),              # LN g/b
            pl.BlockSpec((F, C_pad), lambda b: (0, 0)),                # fc W
            pl.BlockSpec((1, C_pad), lambda b: (0, 0)),                # fc b
        ],
        out_specs=[
            pl.BlockSpec((b_tile, T, F), lambda b: (b, 0, 0)),         # logits
            pl.BlockSpec((b_tile, T, C_pad), lambda b: (b, 0, 0)),     # scores
        ],
    )
    out_shape = (jax.ShapeDtypeStruct((B, T, F), jnp.float32),
                 jax.ShapeDtypeStruct((B, T, C_pad), jnp.bfloat16))

    logits, scores = pl.pallas_call(
        kernel,
        out_shape=out_shape,
        grid_spec=grid_spec,
        compiler_params=pltpu.CompilerParams(
            dimension_semantics=("parallel",),
            # explicit: v5e scoped-VMEM default is only 16 MiB.
            vmem_limit_bytes=32 * 1024 * 1024),
    )(x, params["w"], params["ln"], params["fc_w_pad"], params["fc_b_pad"])

    beats = jnp.argmax(scores[..., :n_class].astype(jnp.float32),
                       axis=-1).astype(jnp.int32)
    return beats, logits


# ----------------------------------------------------------------------------
# Parameter construction (packed layouts the kernel expects)
# ----------------------------------------------------------------------------
def init_params(key, source, n_freq, n_class, weights):
    keys = jax.random.split(key, 7)
    F = n_freq

    def mat(k, shape):
        return (0.05 * jax.random.normal(k, shape)).astype(jnp.float32)

    wq = mat(keys[0], (source, F, F))
    wk = mat(keys[1], (source, F, F))
    wv = mat(keys[2], (source, F, F))
    w1 = mat(keys[3], (source, F, F))
    w2 = mat(keys[4], (source, F, F))
    wf = mat(keys[5], (source, F, F))
    # all per-source matmul weights packed on a LEADING dim -> one resident DMA,
    # leading-dim slices in the kernel (no lane-slice relayouts), stored bf16.
    w_all = jnp.stack([wq, wk, wv, w1, w2, wf], axis=1).astype(jnp.bfloat16)

    g1 = jnp.ones((source, 1, F), jnp.float32)
    b1 = jnp.zeros((source, 1, F), jnp.float32)
    g2 = jnp.ones((source, 1, F), jnp.float32)
    b2 = jnp.zeros((source, 1, F), jnp.float32)
    ln = jnp.concatenate([g1, b1, g2, b2], axis=1)             # [S, 4, F] f32

    c_pad = max(LANE, ((n_class + LANE - 1) // LANE) * LANE)
    fc_w = mat(keys[6], (F, n_class))
    fc_w_pad = (jnp.zeros((F, c_pad), jnp.float32)
                .at[:, :n_class].set(fc_w).astype(jnp.bfloat16))
    # reset_parameters(0.05): bias filled with -log(1/0.05 - 1)
    fc_b = jnp.full((1, n_class), -math.log(1.0 / 0.05 - 1.0), jnp.float32)
    fc_b_pad = jnp.zeros((1, c_pad), jnp.float32).at[:, :n_class].set(fc_b)

    return {
        "w": w_all,                  # [S, 6, F, F] bf16
        "ln": ln,                    # [S, 4, F] f32
        "fc_w_pad": fc_w_pad,        # [F, c_pad] bf16
        "fc_b_pad": fc_b_pad,        # [1, c_pad] f32
        "src_weights": tuple(float(w) for w in weights),   # static constants
        "n_class": n_class,
    }


if __name__ == "__main__":
    # Small shapes consistent with the forward: input [B, source, T, n_freq]
    B, SOURCE, T, N_FREQ, N_CLASS = 2, 3, 8, 32, 3
    WEIGHTS = (0.4, 0.3, 0.3)

    key = jax.random.PRNGKey(0)
    k_in, k_par = jax.random.split(key)
    x = jax.random.normal(k_in, (B, SOURCE, T, N_FREQ), dtype=jnp.float32)
    params = init_params(k_par, SOURCE, N_FREQ, N_CLASS, WEIGHTS)

    beats, logits = beatnet_forward(x, params)
    jax.block_until_ready(beats)
    jax.block_until_ready(logits)

    assert beats.shape == (B, T) and beats.dtype == jnp.int32
    assert logits.shape == (B, T, N_FREQ) and logits.dtype == jnp.float32
    print("KERNEL_OK")
</pallas_src>

<mosaic_0001>
module attributes {stable_mosaic.version = 11 : i64} {
  func.func @beatnet_kernel(%arg0: i32, %arg1: memref<1x3x8x32xf32, #tpu.memory_space<vmem>>, %arg2: memref<3x6x32x32xbf16, #tpu.memory_space<vmem>>, %arg3: memref<3x4x32xf32, #tpu.memory_space<vmem>>, %arg4: memref<32x128xbf16, #tpu.memory_space<vmem>>, %arg5: memref<1x128xf32, #tpu.memory_space<vmem>>, %arg6: memref<1x8x32xf32, #tpu.memory_space<vmem>>, %arg7: memref<1x8x128xbf16, #tpu.memory_space<vmem>>) attributes {dimension_semantics = [#tpu.dimension_semantics<parallel>], iteration_bounds = array<i64: 2>, scalar_prefetch = 0 : i64, scratch_operands = 0 : i64, tpu.core_type = #tpu.core_type<tc>, window_params = [{transform_indices = @transform_0, window_bounds = array<i64: 1, 3, 8, 32>}, {pipeline_mode = #tpu.pipeline_mode<synchronous>, transform_indices = @transform_1, window_bounds = array<i64: 3, 6, 32, 32>}, {pipeline_mode = #tpu.pipeline_mode<synchronous>, transform_indices = @transform_2, window_bounds = array<i64: 3, 4, 32>}, {pipeline_mode = #tpu.pipeline_mode<synchronous>, transform_indices = @transform_3, window_bounds = array<i64: 32, 128>}, {pipeline_mode = #tpu.pipeline_mode<synchronous>, transform_indices = @transform_4, window_bounds = array<i64: 1, 128>}, {transform_indices = @transform_5, window_bounds = array<i64: 1, 8, 32>}, {transform_indices = @transform_6, window_bounds = array<i64: 1, 8, 128>}]} {
    %c0 = arith.constant 0 : index
    %c0_0 = arith.constant 0 : index
    %c0_1 = arith.constant 0 : index
    %c0_2 = arith.constant 0 : index
    %0 = vector.load %arg1[%c0, %c0_0, %c0_1, %c0_2] : memref<1x3x8x32xf32, #tpu.memory_space<vmem>>, vector<1x3x8x32xf32>
    %c0_3 = arith.constant 0 : index
    %c0_4 = arith.constant 0 : index
    %c0_5 = arith.constant 0 : index
    %c0_6 = arith.constant 0 : index
    %1 = vector.load %arg2[%c0_3, %c0_4, %c0_5, %c0_6] : memref<3x6x32x32xbf16, #tpu.memory_space<vmem>>, vector<3x6x32x32xbf16>
    %c0_7 = arith.constant 0 : index
    %c0_8 = arith.constant 0 : index
    %c0_9 = arith.constant 0 : index
    %2 = vector.load %arg3[%c0_7, %c0_8, %c0_9] : memref<3x4x32xf32, #tpu.memory_space<vmem>>, vector<3x4x32xf32>
    %cst = arith.constant 0.000000e+00 : f32
    %3 = vector.broadcast %cst : f32 to vector<8x32xf32>
    %cst_10 = arith.constant 0.000000e+00 : f32
    %4 = vector.broadcast %cst_10 : f32 to vector<8x32xf32>
    %5 = vector.extract_strided_slice %0 {offsets = [0, 0, 0, 0], sizes = [1, 1, 8, 32], strides = [1, 1, 1, 1]} : vector<1x3x8x32xf32> to vector<1x1x8x32xf32>
    %6 = vector.shape_cast %5 : vector<1x1x8x32xf32> to vector<1x8x32xf32>
    %7 = vector.shape_cast %6 : vector<1x8x32xf32> to vector<8x32xf32>
    %8 = arith.truncf %7 : vector<8x32xf32> to vector<8x32xbf16>
    %9 = vector.extract_strided_slice %1 {offsets = [0, 0, 0, 0], sizes = [1, 1, 32, 32], strides = [1, 1, 1, 1]} : vector<3x6x32x32xbf16> to vector<1x1x32x32xbf16>
    %10 = vector.shape_cast %9 : vector<1x1x32x32xbf16> to vector<32x32xbf16>
    %11 = vector.extract_strided_slice %1 {offsets = [0, 1, 0, 0], sizes = [1, 1, 32, 32], strides = [1, 1, 1, 1]} : vector<3x6x32x32xbf16> to vector<1x1x32x32xbf16>
    %12 = vector.shape_cast %11 : vector<1x1x32x32xbf16> to vector<32x32xbf16>
    %13 = vector.extract_strided_slice %1 {offsets = [0, 2, 0, 0], sizes = [1, 1, 32, 32], strides = [1, 1, 1, 1]} : vector<3x6x32x32xbf16> to vector<1x1x32x32xbf16>
    %14 = vector.shape_cast %13 : vector<1x1x32x32xbf16> to vector<32x32xbf16>
    %15 = vector.extract_strided_slice %1 {offsets = [0, 3, 0, 0], sizes = [1, 1, 32, 32], strides = [1, 1, 1, 1]} : vector<3x6x32x32xbf16> to vector<1x1x32x32xbf16>
    %16 = vector.shape_cast %15 : vector<1x1x32x32xbf16> to vector<32x32xbf16>
    %17 = vector.extract_strided_slice %1 {offsets = [0, 4, 0, 0], sizes = [1, 1, 32, 32], strides = [1, 1, 1, 1]} : vector<3x6x32x32xbf16> to vector<1x1x32x32xbf16>
    %18 = vector.shape_cast %17 : vector<1x1x32x32xbf16> to vector<32x32xbf16>
    %19 = vector.extract_strided_slice %1 {offsets = [0, 5, 0, 0], sizes = [1, 1, 32, 32], strides = [1, 1, 1, 1]} : vector<3x6x32x32xbf16> to vector<1x1x32x32xbf16>
    %20 = vector.shape_cast %19 : vector<1x1x32x32xbf16> to vector<32x32xbf16>
    %21 = vector.extract_strided_slice %2 {offsets = [0, 0, 0], sizes = [1, 1, 32], strides = [1, 1, 1]} : vector<3x4x32xf32> to vector<1x1x32xf32>
    %22 = vector.shape_cast %21 : vector<1x1x32xf32> to vector<1x32xf32>
    %23 = vector.extract_strided_slice %2 {offsets = [0, 1, 0], sizes = [1, 1, 32], strides = [1, 1, 1]} : vector<3x4x32xf32> to vector<1x1x32xf32>
    %24 = vector.shape_cast %23 : vector<1x1x32xf32> to vector<1x32xf32>
    %25 = vector.extract_strided_slice %2 {offsets = [0, 2, 0], sizes = [1, 1, 32], strides = [1, 1, 1]} : vector<3x4x32xf32> to vector<1x1x32xf32>
    %26 = vector.shape_cast %25 : vector<1x1x32xf32> to vector<1x32xf32>
    %27 = vector.extract_strided_slice %2 {offsets = [0, 3, 0], sizes = [1, 1, 32], strides = [1, 1, 1]} : vector<3x4x32xf32> to vector<1x1x32xf32>
    %28 = vector.shape_cast %27 : vector<1x1x32xf32> to vector<1x32xf32>
    %cst_11 = arith.constant dense<0.000000e+00> : vector<8x32xf32>
    %29 = tpu.matmul %8, %10, %cst_11 {dimension_numbers = #tpu.dot_dimension_numbers<[1], [0], [0], [1], [0, 0, 1, 1], [], []>} : vector<8x32xbf16>, vector<32x32xbf16>, vector<8x32xf32> -> vector<8x32xf32>
    %cst_12 = arith.constant dense<0.000000e+00> : vector<8x32xf32>
    %30 = tpu.matmul %8, %12, %cst_12 {dimension_numbers = #tpu.dot_dimension_numbers<[1], [0], [0], [1], [0, 0, 1, 1], [], []>} : vector<8x32xbf16>, vector<32x32xbf16>, vector<8x32xf32> -> vector<8x32xf32>
    %cst_13 = arith.constant dense<0.000000e+00> : vector<8x32xf32>
    %31 = tpu.matmul %8, %14, %cst_13 {dimension_numbers = #tpu.dot_dimension_numbers<[1], [0], [0], [1], [0, 0, 1, 1], [], []>} : vector<8x32xbf16>, vector<32x32xbf16>, vector<8x32xf32> -> vector<8x32xf32>
    %cst_14 = arith.constant 0.176776692 : f32
    %32 = vector.broadcast %cst_14 : f32 to vector<8x32xf32>
    %33 = arith.mulf %29, %32 : vector<8x32xf32>
    %34 = arith.truncf %33 : vector<8x32xf32> to vector<8x32xbf16>
    %35 = vector.shape_cast %34 : vector<8x32xbf16> to vector<1x8x32xbf16>
    %36 = arith.truncf %30 : vector<8x32xf32> to vector<8x32xbf16>
    %37 = vector.shape_cast %36 : vector<8x32xbf16> to vector<1x8x32xbf16>
    %38 = arith.truncf %31 : vector<8x32xf32> to vector<8x32xbf16>
    %39 = vector.shape_cast %38 : vector<8x32xbf16> to vector<1x8x32xbf16>
    "tpu.trace_start"() <{level = 10 : i32, message = "btf,bsf->bts"}> : () -> ()
    %cst_15 = arith.constant dense<0.000000e+00> : vector<1x8x8xf32>
    %40 = tpu.matmul %35, %37, %cst_15 {dimension_numbers = #tpu.dot_dimension_numbers<[2], [2], [1], [1], [0, 0, 0, 1, 1, 1], [0], [0]>} : vector<1x8x32xbf16>, vector<1x8x32xbf16>, vector<1x8x8xf32> -> vector<1x8x8xf32>
    "tpu.trace_stop"() : () -> ()
    %cst_16 = arith.constant dense<0xFF800000> : vector<1x8xf32>
    %41 = vector.multi_reduction <maximumf>, %40, %cst_16 [2] : vector<1x8x8xf32> to vector<1x8xf32>
    %42 = vector.shape_cast %41 : vector<1x8xf32> to vector<1x8x1xf32>
    %43 = vector.broadcast %42 : vector<1x8x1xf32> to vector<1x8x8xf32>
    %44 = arith.subf %40, %43 : vector<1x8x8xf32>
    %45 = math.exp %44 : vector<1x8x8xf32>
    %cst_17 = arith.constant dense<0.000000e+00> : vector<1x8xf32>
    %46 = vector.multi_reduction <add>, %45, %cst_17 [2] : vector<1x8x8xf32> to vector<1x8xf32>
    %47 = vector.shape_cast %46 : vector<1x8xf32> to vector<1x8x1xf32>
    %48 = tpu.reciprocal %47 {approx = true} : vector<1x8x1xf32> -> vector<1x8x1xf32>
    %49 = vector.broadcast %48 : vector<1x8x1xf32> to vector<1x8x8xf32>
    %50 = arith.mulf %45, %49 : vector<1x8x8xf32>
    %51 = arith.truncf %50 : vector<1x8x8xf32> to vector<1x8x8xbf16>
    "tpu.trace_start"() <{level = 10 : i32, message = "bts,bsf->btf"}> : () -> ()
    %cst_18 = arith.constant dense<0.000000e+00> : vector<1x8x32xf32>
    %52 = tpu.matmul %51, %39, %cst_18 {dimension_numbers = #tpu.dot_dimension_numbers<[2], [1], [1], [2], [0, 0, 0, 1, 1, 2], [0], [0]>} : vector<1x8x8xbf16>, vector<1x8x32xbf16>, vector<1x8x32xf32> -> vector<1x8x32xf32>
    "tpu.trace_stop"() : () -> ()
    %53 = vector.shape_cast %52 : vector<1x8x32xf32> to vector<8x32xf32>
    %54 = arith.addf %7, %53 : vector<8x32xf32>
    %cst_19 = arith.constant dense<0.000000e+00> : vector<8xf32>
    %55 = vector.multi_reduction <add>, %54, %cst_19 [1] : vector<8x32xf32> to vector<8xf32>
    %56 = vector.shape_cast %55 : vector<8xf32> to vector<8x1xf32>
    %cst_20 = arith.constant 3.200000e+01 : f32
    %57 = vector.broadcast %cst_20 : f32 to vector<8x1xf32>
    %58 = arith.divf %56, %57 : vector<8x1xf32>
    %59 = vector.broadcast %58 : vector<8x1xf32> to vector<8x32xf32>
    %60 = arith.subf %54, %59 : vector<8x32xf32>
    %61 = arith.mulf %60, %60 : vector<8x32xf32>
    %cst_21 = arith.constant dense<0.000000e+00> : vector<8xf32>
    %62 = vector.multi_reduction <add>, %61, %cst_21 [1] : vector<8x32xf32> to vector<8xf32>
    %63 = vector.shape_cast %62 : vector<8xf32> to vector<8x1xf32>
    %cst_22 = arith.constant 3.200000e+01 : f32
    %64 = vector.broadcast %cst_22 : f32 to vector<8x1xf32>
    %65 = arith.divf %63, %64 : vector<8x1xf32>
    %66 = vector.broadcast %58 : vector<8x1xf32> to vector<8x32xf32>
    %67 = arith.subf %54, %66 : vector<8x32xf32>
    %cst_23 = arith.constant 9.99999974E-6 : f32
    %68 = vector.broadcast %cst_23 : f32 to vector<8x1xf32>
    %69 = arith.addf %65, %68 : vector<8x1xf32>
    %70 = math.rsqrt %69 : vector<8x1xf32>
    %71 = vector.broadcast %70 : vector<8x1xf32> to vector<8x32xf32>
    %72 = arith.mulf %67, %71 : vector<8x32xf32>
    %73 = vector.broadcast %22 : vector<1x32xf32> to vector<8x32xf32>
    %74 = arith.mulf %72, %73 : vector<8x32xf32>
    %75 = vector.broadcast %24 : vector<1x32xf32> to vector<8x32xf32>
    %76 = arith.addf %74, %75 : vector<8x32xf32>
    %77 = arith.truncf %76 : vector<8x32xf32> to vector<8x32xbf16>
    %cst_24 = arith.constant dense<0.000000e+00> : vector<8x32xf32>
    %78 = tpu.matmul %77, %16, %cst_24 {dimension_numbers = #tpu.dot_dimension_numbers<[1], [0], [0], [1], [0, 0, 1, 1], [], []>} : vector<8x32xbf16>, vector<32x32xbf16>, vector<8x32xf32> -> vector<8x32xf32>
    %cst_25 = arith.constant 0.000000e+00 : f32
    %79 = vector.broadcast %cst_25 : f32 to vector<8x32xf32>
    %80 = arith.maximumf %78, %79 : vector<8x32xf32>
    %81 = arith.truncf %80 : vector<8x32xf32> to vector<8x32xbf16>
    %cst_26 = arith.constant dense<0.000000e+00> : vector<8x32xf32>
    %82 = tpu.matmul %81, %18, %cst_26 {dimension_numbers = #tpu.dot_dimension_numbers<[1], [0], [0], [1], [0, 0, 1, 1], [], []>} : vector<8x32xbf16>, vector<32x32xbf16>, vector<8x32xf32> -> vector<8x32xf32>
    %83 = arith.addf %76, %82 : vector<8x32xf32>
    %cst_27 = arith.constant dense<0.000000e+00> : vector<8xf32>
    %84 = vector.multi_reduction <add>, %83, %cst_27 [1] : vector<8x32xf32> to vector<8xf32>
    %85 = vector.shape_cast %84 : vector<8xf32> to vector<8x1xf32>
    %cst_28 = arith.constant 3.200000e+01 : f32
    %86 = vector.broadcast %cst_28 : f32 to vector<8x1xf32>
    %87 = arith.divf %85, %86 : vector<8x1xf32>
    %88 = vector.broadcast %87 : vector<8x1xf32> to vector<8x32xf32>
    %89 = arith.subf %83, %88 : vector<8x32xf32>
    %90 = arith.mulf %89, %89 : vector<8x32xf32>
    %cst_29 = arith.constant dense<0.000000e+00> : vector<8xf32>
    %91 = vector.multi_reduction <add>, %90, %cst_29 [1] : vector<8x32xf32> to vector<8xf32>
    %92 = vector.shape_cast %91 : vector<8xf32> to vector<8x1xf32>
    %cst_30 = arith.constant 3.200000e+01 : f32
    %93 = vector.broadcast %cst_30 : f32 to vector<8x1xf32>
    %94 = arith.divf %92, %93 : vector<8x1xf32>
    %95 = vector.broadcast %87 : vector<8x1xf32> to vector<8x32xf32>
    %96 = arith.subf %83, %95 : vector<8x32xf32>
    %cst_31 = arith.constant 9.99999974E-6 : f32
    %97 = vector.broadcast %cst_31 : f32 to vector<8x1xf32>
    %98 = arith.addf %94, %97 : vector<8x1xf32>
    %99 = math.rsqrt %98 : vector<8x1xf32>
    %100 = vector.broadcast %99 : vector<8x1xf32> to vector<8x32xf32>
    %101 = arith.mulf %96, %100 : vector<8x32xf32>
    %102 = vector.broadcast %26 : vector<1x32xf32> to vector<8x32xf32>
    %103 = arith.mulf %101, %102 : vector<8x32xf32>
    %104 = vector.broadcast %28 : vector<1x32xf32> to vector<8x32xf32>
    %105 = arith.addf %103, %104 : vector<8x32xf32>
    %106 = arith.truncf %105 : vector<8x32xf32> to vector<8x32xbf16>
    %cst_32 = arith.constant dense<0.000000e+00> : vector<8x32xf32>
    %107 = tpu.matmul %106, %20, %cst_32 {dimension_numbers = #tpu.dot_dimension_numbers<[1], [0], [0], [1], [0, 0, 1, 1], [], []>} : vector<8x32xbf16>, vector<32x32xbf16>, vector<8x32xf32> -> vector<8x32xf32>
    %cst_33 = arith.constant 4.000000e-01 : f32
    %108 = vector.broadcast %cst_33 : f32 to vector<8x32xf32>
    %109 = arith.mulf %108, %105 : vector<8x32xf32>
    %110 = arith.addf %3, %109 : vector<8x32xf32>
    %cst_34 = arith.constant 4.000000e-01 : f32
    %111 = vector.broadcast %cst_34 : f32 to vector<8x32xf32>
    %112 = arith.mulf %111, %107 : vector<8x32xf32>
    %113 = arith.addf %4, %112 : vector<8x32xf32>
    %114 = vector.extract_strided_slice %0 {offsets = [0, 1, 0, 0], sizes = [1, 1, 8, 32], strides = [1, 1, 1, 1]} : vector<1x3x8x32xf32> to vector<1x1x8x32xf32>
    %115 = vector.shape_cast %114 : vector<1x1x8x32xf32> to vector<1x8x32xf32>
    %116 = vector.shape_cast %115 : vector<1x8x32xf32> to vector<8x32xf32>
    %117 = arith.truncf %116 : vector<8x32xf32> to vector<8x32xbf16>
    %118 = vector.extract_strided_slice %1 {offsets = [1, 0, 0, 0], sizes = [1, 1, 32, 32], strides = [1, 1, 1, 1]} : vector<3x6x32x32xbf16> to vector<1x1x32x32xbf16>
    %119 = vector.shape_cast %118 : vector<1x1x32x32xbf16> to vector<32x32xbf16>
    %120 = vector.extract_strided_slice %1 {offsets = [1, 1, 0, 0], sizes = [1, 1, 32, 32], strides = [1, 1, 1, 1]} : vector<3x6x32x32xbf16> to vector<1x1x32x32xbf16>
    %121 = vector.shape_cast %120 : vector<1x1x32x32xbf16> to vector<32x32xbf16>
    %122 = vector.extract_strided_slice %1 {offsets = [1, 2, 0, 0], sizes = [1, 1, 32, 32], strides = [1, 1, 1, 1]} : vector<3x6x32x32xbf16> to vector<1x1x32x32xbf16>
    %123 = vector.shape_cast %122 : vector<1x1x32x32xbf16> to vector<32x32xbf16>
    %124 = vector.extract_strided_slice %1 {offsets = [1, 3, 0, 0], sizes = [1, 1, 32, 32], strides = [1, 1, 1, 1]} : vector<3x6x32x32xbf16> to vector<1x1x32x32xbf16>
    %125 = vector.shape_cast %124 : vector<1x1x32x32xbf16> to vector<32x32xbf16>
    %126 = vector.extract_strided_slice %1 {offsets = [1, 4, 0, 0], sizes = [1, 1, 32, 32], strides = [1, 1, 1, 1]} : vector<3x6x32x32xbf16> to vector<1x1x32x32xbf16>
    %127 = vector.shape_cast %126 : vector<1x1x32x32xbf16> to vector<32x32xbf16>
    %128 = vector.extract_strided_slice %1 {offsets = [1, 5, 0, 0], sizes = [1, 1, 32, 32], strides = [1, 1, 1, 1]} : vector<3x6x32x32xbf16> to vector<1x1x32x32xbf16>
    %129 = vector.shape_cast %128 : vector<1x1x32x32xbf16> to vector<32x32xbf16>
    %130 = vector.extract_strided_slice %2 {offsets = [1, 0, 0], sizes = [1, 1, 32], strides = [1, 1, 1]} : vector<3x4x32xf32> to vector<1x1x32xf32>
    %131 = vector.shape_cast %130 : vector<1x1x32xf32> to vector<1x32xf32>
    %132 = vector.extract_strided_slice %2 {offsets = [1, 1, 0], sizes = [1, 1, 32], strides = [1, 1, 1]} : vector<3x4x32xf32> to vector<1x1x32xf32>
    %133 = vector.shape_cast %132 : vector<1x1x32xf32> to vector<1x32xf32>
    %134 = vector.extract_strided_slice %2 {offsets = [1, 2, 0], sizes = [1, 1, 32], strides = [1, 1, 1]} : vector<3x4x32xf32> to vector<1x1x32xf32>
    %135 = vector.shape_cast %134 : vector<1x1x32xf32> to vector<1x32xf32>
    %136 = vector.extract_strided_slice %2 {offsets = [1, 3, 0], sizes = [1, 1, 32], strides = [1, 1, 1]} : vector<3x4x32xf32> to vector<1x1x32xf32>
    %137 = vector.shape_cast %136 : vector<1x1x32xf32> to vector<1x32xf32>
    %cst_35 = arith.constant dense<0.000000e+00> : vector<8x32xf32>
    %138 = tpu.matmul %117, %119, %cst_35 {dimension_numbers = #tpu.dot_dimension_numbers<[1], [0], [0], [1], [0, 0, 1, 1], [], []>} : vector<8x32xbf16>, vector<32x32xbf16>, vector<8x32xf32> -> vector<8x32xf32>
    %cst_36 = arith.constant dense<0.000000e+00> : vector<8x32xf32>
    %139 = tpu.matmul %117, %121, %cst_36 {dimension_numbers = #tpu.dot_dimension_numbers<[1], [0], [0], [1], [0, 0, 1, 1], [], []>} : vector<8x32xbf16>, vector<32x32xbf16>, vector<8x32xf32> -> vector<8x32xf32>
    %cst_37 = arith.constant dense<0.000000e+00> : vector<8x32xf32>
    %140 = tpu.matmul %117, %123, %cst_37 {dimension_numbers = #tpu.dot_dimension_numbers<[1], [0], [0], [1], [0, 0, 1, 1], [], []>} : vector<8x32xbf16>, vector<32x32xbf16>, vector<8x32xf32> -> vector<8x32xf32>
    %cst_38 = arith.constant 0.176776692 : f32
    %141 = vector.broadcast %cst_38 : f32 to vector<8x32xf32>
    %142 = arith.mulf %138, %141 : vector<8x32xf32>
    %143 = arith.truncf %142 : vector<8x32xf32> to vector<8x32xbf16>
    %144 = vector.shape_cast %143 : vector<8x32xbf16> to vector<1x8x32xbf16>
    %145 = arith.truncf %139 : vector<8x32xf32> to vector<8x32xbf16>
    %146 = vector.shape_cast %145 : vector<8x32xbf16> to vector<1x8x32xbf16>
    %147 = arith.truncf %140 : vector<8x32xf32> to vector<8x32xbf16>
    %148 = vector.shape_cast %147 : vector<8x32xbf16> to vector<1x8x32xbf16>
    "tpu.trace_start"() <{level = 10 : i32, message = "btf,bsf->bts"}> : () -> ()
    %cst_39 = arith.constant dense<0.000000e+00> : vector<1x8x8xf32>
    %149 = tpu.matmul %144, %146, %cst_39 {dimension_numbers = #tpu.dot_dimension_numbers<[2], [2], [1], [1], [0, 0, 0, 1, 1, 1], [0], [0]>} : vector<1x8x32xbf16>, vector<1x8x32xbf16>, vector<1x8x8xf32> -> vector<1x8x8xf32>
    "tpu.trace_stop"() : () -> ()
    %cst_40 = arith.constant dense<0xFF800000> : vector<1x8xf32>
    %150 = vector.multi_reduction <maximumf>, %149, %cst_40 [2] : vector<1x8x8xf32> to vector<1x8xf32>
    %151 = vector.shape_cast %150 : vector<1x8xf32> to vector<1x8x1xf32>
    %152 = vector.broadcast %151 : vector<1x8x1xf32> to vector<1x8x8xf32>
    %153 = arith.subf %149, %152 : vector<1x8x8xf32>
    %154 = math.exp %153 : vector<1x8x8xf32>
    %cst_41 = arith.constant dense<0.000000e+00> : vector<1x8xf32>
    %155 = vector.multi_reduction <add>, %154, %cst_41 [2] : vector<1x8x8xf32> to vector<1x8xf32>
    %156 = vector.shape_cast %155 : vector<1x8xf32> to vector<1x8x1xf32>
    %157 = tpu.reciprocal %156 {approx = true} : vector<1x8x1xf32> -> vector<1x8x1xf32>
    %158 = vector.broadcast %157 : vector<1x8x1xf32> to vector<1x8x8xf32>
    %159 = arith.mulf %154, %158 : vector<1x8x8xf32>
    %160 = arith.truncf %159 : vector<1x8x8xf32> to vector<1x8x8xbf16>
    "tpu.trace_start"() <{level = 10 : i32, message = "bts,bsf->btf"}> : () -> ()
    %cst_42 = arith.constant dense<0.000000e+00> : vector<1x8x32xf32>
    %161 = tpu.matmul %160, %148, %cst_42 {dimension_numbers = #tpu.dot_dimension_numbers<[2], [1], [1], [2], [0, 0, 0, 1, 1, 2], [0], [0]>} : vector<1x8x8xbf16>, vector<1x8x32xbf16>, vector<1x8x32xf32> -> vector<1x8x32xf32>
    "tpu.trace_stop"() : () -> ()
    %162 = vector.shape_cast %161 : vector<1x8x32xf32> to vector<8x32xf32>
    %163 = arith.addf %116, %162 : vector<8x32xf32>
    %cst_43 = arith.constant dense<0.000000e+00> : vector<8xf32>
    %164 = vector.multi_reduction <add>, %163, %cst_43 [1] : vector<8x32xf32> to vector<8xf32>
    %165 = vector.shape_cast %164 : vector<8xf32> to vector<8x1xf32>
    %cst_44 = arith.constant 3.200000e+01 : f32
    %166 = vector.broadcast %cst_44 : f32 to vector<8x1xf32>
    %167 = arith.divf %165, %166 : vector<8x1xf32>
    %168 = vector.broadcast %167 : vector<8x1xf32> to vector<8x32xf32>
    %169 = arith.subf %163, %168 : vector<8x32xf32>
    %170 = arith.mulf %169, %169 : vector<8x32xf32>
    %cst_45 = arith.constant dense<0.000000e+00> : vector<8xf32>
    %171 = vector.multi_reduction <add>, %170, %cst_45 [1] : vector<8x32xf32> to vector<8xf32>
    %172 = vector.shape_cast %171 : vector<8xf32> to vector<8x1xf32>
    %cst_46 = arith.constant 3.200000e+01 : f32
    %173 = vector.broadcast %cst_46 : f32 to vector<8x1xf32>
    %174 = arith.divf %172, %173 : vector<8x1xf32>
    %175 = vector.broadcast %167 : vector<8x1xf32> to vector<8x32xf32>
    %176 = arith.subf %163, %175 : vector<8x32xf32>
    %cst_47 = arith.constant 9.99999974E-6 : f32
    %177 = vector.broadcast %cst_47 : f32 to vector<8x1xf32>
    %178 = arith.addf %174, %177 : vector<8x1xf32>
    %179 = math.rsqrt %178 : vector<8x1xf32>
    %180 = vector.broadcast %179 : vector<8x1xf32> to vector<8x32xf32>
    %181 = arith.mulf %176, %180 : vector<8x32xf32>
    %182 = vector.broadcast %131 : vector<1x32xf32> to vector<8x32xf32>
    %183 = arith.mulf %181, %182 : vector<8x32xf32>
    %184 = vector.broadcast %133 : vector<1x32xf32> to vector<8x32xf32>
    %185 = arith.addf %183, %184 : vector<8x32xf32>
    %186 = arith.truncf %185 : vector<8x32xf32> to vector<8x32xbf16>
    %cst_48 = arith.constant dense<0.000000e+00> : vector<8x32xf32>
    %187 = tpu.matmul %186, %125, %cst_48 {dimension_numbers = #tpu.dot_dimension_numbers<[1], [0], [0], [1], [0, 0, 1, 1], [], []>} : vector<8x32xbf16>, vector<32x32xbf16>, vector<8x32xf32> -> vector<8x32xf32>
    %cst_49 = arith.constant 0.000000e+00 : f32
    %188 = vector.broadcast %cst_49 : f32 to vector<8x32xf32>
    %189 = arith.maximumf %187, %188 : vector<8x32xf32>
    %190 = arith.truncf %189 : vector<8x32xf32> to vector<8x32xbf16>
    %cst_50 = arith.constant dense<0.000000e+00> : vector<8x32xf32>
    %191 = tpu.matmul %190, %127, %cst_50 {dimension_numbers = #tpu.dot_dimension_numbers<[1], [0], [0], [1], [0, 0, 1, 1], [], []>} : vector<8x32xbf16>, vector<32x32xbf16>, vector<8x32xf32> -> vector<8x32xf32>
    %192 = arith.addf %185, %191 : vector<8x32xf32>
    %cst_51 = arith.constant dense<0.000000e+00> : vector<8xf32>
    %193 = vector.multi_reduction <add>, %192, %cst_51 [1] : vector<8x32xf32> to vector<8xf32>
    %194 = vector.shape_cast %193 : vector<8xf32> to vector<8x1xf32>
    %cst_52 = arith.constant 3.200000e+01 : f32
    %195 = vector.broadcast %cst_52 : f32 to vector<8x1xf32>
    %196 = arith.divf %194, %195 : vector<8x1xf32>
    %197 = vector.broadcast %196 : vector<8x1xf32> to vector<8x32xf32>
    %198 = arith.subf %192, %197 : vector<8x32xf32>
    %199 = arith.mulf %198, %198 : vector<8x32xf32>
    %cst_53 = arith.constant dense<0.000000e+00> : vector<8xf32>
    %200 = vector.multi_reduction <add>, %199, %cst_53 [1] : vector<8x32xf32> to vector<8xf32>
    %201 = vector.shape_cast %200 : vector<8xf32> to vector<8x1xf32>
    %cst_54 = arith.constant 3.200000e+01 : f32
    %202 = vector.broadcast %cst_54 : f32 to vector<8x1xf32>
    %203 = arith.divf %201, %202 : vector<8x1xf32>
    %204 = vector.broadcast %196 : vector<8x1xf32> to vector<8x32xf32>
    %205 = arith.subf %192, %204 : vector<8x32xf32>
    %cst_55 = arith.constant 9.99999974E-6 : f32
    %206 = vector.broadcast %cst_55 : f32 to vector<8x1xf32>
    %207 = arith.addf %203, %206 : vector<8x1xf32>
    %208 = math.rsqrt %207 : vector<8x1xf32>
    %209 = vector.broadcast %208 : vector<8x1xf32> to vector<8x32xf32>
    %210 = arith.mulf %205, %209 : vector<8x32xf32>
    %211 = vector.broadcast %135 : vector<1x32xf32> to vector<8x32xf32>
    %212 = arith.mulf %210, %211 : vector<8x32xf32>
    %213 = vector.broadcast %137 : vector<1x32xf32> to vector<8x32xf32>
    %214 = arith.addf %212, %213 : vector<8x32xf32>
    %215 = arith.truncf %214 : vector<8x32xf32> to vector<8x32xbf16>
    %cst_56 = arith.constant dense<0.000000e+00> : vector<8x32xf32>
    %216 = tpu.matmul %215, %129, %cst_56 {dimension_numbers = #tpu.dot_dimension_numbers<[1], [0], [0], [1], [0, 0, 1, 1], [], []>} : vector<8x32xbf16>, vector<32x32xbf16>, vector<8x32xf32> -> vector<8x32xf32>
    %cst_57 = arith.constant 3.000000e-01 : f32
    %217 = vector.broadcast %cst_57 : f32 to vector<8x32xf32>
    %218 = arith.mulf %217, %214 : vector<8x32xf32>
    %219 = arith.addf %110, %218 : vector<8x32xf32>
    %cst_58 = arith.constant 3.000000e-01 : f32
    %220 = vector.broadcast %cst_58 : f32 to vector<8x32xf32>
    %221 = arith.mulf %220, %216 : vector<8x32xf32>
    %222 = arith.addf %113, %221 : vector<8x32xf32>
    %223 = vector.extract_strided_slice %0 {offsets = [0, 2, 0, 0], sizes = [1, 1, 8, 32], strides = [1, 1, 1, 1]} : vector<1x3x8x32xf32> to vector<1x1x8x32xf32>
    %224 = vector.shape_cast %223 : vector<1x1x8x32xf32> to vector<1x8x32xf32>
    %225 = vector.shape_cast %224 : vector<1x8x32xf32> to vector<8x32xf32>
    %226 = arith.truncf %225 : vector<8x32xf32> to vector<8x32xbf16>
    %227 = vector.extract_strided_slice %1 {offsets = [2, 0, 0, 0], sizes = [1, 1, 32, 32], strides = [1, 1, 1, 1]} : vector<3x6x32x32xbf16> to vector<1x1x32x32xbf16>
    %228 = vector.shape_cast %227 : vector<1x1x32x32xbf16> to vector<32x32xbf16>
    %229 = vector.extract_strided_slice %1 {offsets = [2, 1, 0, 0], sizes = [1, 1, 32, 32], strides = [1, 1, 1, 1]} : vector<3x6x32x32xbf16> to vector<1x1x32x32xbf16>
    %230 = vector.shape_cast %229 : vector<1x1x32x32xbf16> to vector<32x32xbf16>
    %231 = vector.extract_strided_slice %1 {offsets = [2, 2, 0, 0], sizes = [1, 1, 32, 32], strides = [1, 1, 1, 1]} : vector<3x6x32x32xbf16> to vector<1x1x32x32xbf16>
    %232 = vector.shape_cast %231 : vector<1x1x32x32xbf16> to vector<32x32xbf16>
    %233 = vector.extract_strided_slice %1 {offsets = [2, 3, 0, 0], sizes = [1, 1, 32, 32], strides = [1, 1, 1, 1]} : vector<3x6x32x32xbf16> to vector<1x1x32x32xbf16>
    %234 = vector.shape_cast %233 : vector<1x1x32x32xbf16> to vector<32x32xbf16>
    %235 = vector.extract_strided_slice %1 {offsets = [2, 4, 0, 0], sizes = [1, 1, 32, 32], strides = [1, 1, 1, 1]} : vector<3x6x32x32xbf16> to vector<1x1x32x32xbf16>
    %236 = vector.shape_cast %235 : vector<1x1x32x32xbf16> to vector<32x32xbf16>
    %237 = vector.extract_strided_slice %1 {offsets = [2, 5, 0, 0], sizes = [1, 1, 32, 32], strides = [1, 1, 1, 1]} : vector<3x6x32x32xbf16> to vector<1x1x32x32xbf16>
    %238 = vector.shape_cast %237 : vector<1x1x32x32xbf16> to vector<32x32xbf16>
    %239 = vector.extract_strided_slice %2 {offsets = [2, 0, 0], sizes = [1, 1, 32], strides = [1, 1, 1]} : vector<3x4x32xf32> to vector<1x1x32xf32>
    %240 = vector.shape_cast %239 : vector<1x1x32xf32> to vector<1x32xf32>
    %241 = vector.extract_strided_slice %2 {offsets = [2, 1, 0], sizes = [1, 1, 32], strides = [1, 1, 1]} : vector<3x4x32xf32> to vector<1x1x32xf32>
    %242 = vector.shape_cast %241 : vector<1x1x32xf32> to vector<1x32xf32>
    %243 = vector.extract_strided_slice %2 {offsets = [2, 2, 0], sizes = [1, 1, 32], strides = [1, 1, 1]} : vector<3x4x32xf32> to vector<1x1x32xf32>
    %244 = vector.shape_cast %243 : vector<1x1x32xf32> to vector<1x32xf32>
    %245 = vector.extract_strided_slice %2 {offsets = [2, 3, 0], sizes = [1, 1, 32], strides = [1, 1, 1]} : vector<3x4x32xf32> to vector<1x1x32xf32>
    %246 = vector.shape_cast %245 : vector<1x1x32xf32> to vector<1x32xf32>
    %cst_59 = arith.constant dense<0.000000e+00> : vector<8x32xf32>
    %247 = tpu.matmul %226, %228, %cst_59 {dimension_numbers = #tpu.dot_dimension_numbers<[1], [0], [0], [1], [0, 0, 1, 1], [], []>} : vector<8x32xbf16>, vector<32x32xbf16>, vector<8x32xf32> -> vector<8x32xf32>
    %cst_60 = arith.constant dense<0.000000e+00> : vector<8x32xf32>
    %248 = tpu.matmul %226, %230, %cst_60 {dimension_numbers = #tpu.dot_dimension_numbers<[1], [0], [0], [1], [0, 0, 1, 1], [], []>} : vector<8x32xbf16>, vector<32x32xbf16>, vector<8x32xf32> -> vector<8x32xf32>
    %cst_61 = arith.constant dense<0.000000e+00> : vector<8x32xf32>
    %249 = tpu.matmul %226, %232, %cst_61 {dimension_numbers = #tpu.dot_dimension_numbers<[1], [0], [0], [1], [0, 0, 1, 1], [], []>} : vector<8x32xbf16>, vector<32x32xbf16>, vector<8x32xf32> -> vector<8x32xf32>
    %cst_62 = arith.constant 0.176776692 : f32
    %250 = vector.broadcast %cst_62 : f32 to vector<8x32xf32>
    %251 = arith.mulf %247, %250 : vector<8x32xf32>
    %252 = arith.truncf %251 : vector<8x32xf32> to vector<8x32xbf16>
    %253 = vector.shape_cast %252 : vector<8x32xbf16> to vector<1x8x32xbf16>
    %254 = arith.truncf %248 : vector<8x32xf32> to vector<8x32xbf16>
    %255 = vector.shape_cast %254 : vector<8x32xbf16> to vector<1x8x32xbf16>
    %256 = arith.truncf %249 : vector<8x32xf32> to vector<8x32xbf16>
    %257 = vector.shape_cast %256 : vector<8x32xbf16> to vector<1x8x32xbf16>
    "tpu.trace_start"() <{level = 10 : i32, message = "btf,bsf->bts"}> : () -> ()
    %cst_63 = arith.constant dense<0.000000e+00> : vector<1x8x8xf32>
    %258 = tpu.matmul %253, %255, %cst_63 {dimension_numbers = #tpu.dot_dimension_numbers<[2], [2], [1], [1], [0, 0, 0, 1, 1, 1], [0], [0]>} : vector<1x8x32xbf16>, vector<1x8x32xbf16>, vector<1x8x8xf32> -> vector<1x8x8xf32>
    "tpu.trace_stop"() : () -> ()
    %cst_64 = arith.constant dense<0xFF800000> : vector<1x8xf32>
    %259 = vector.multi_reduction <maximumf>, %258, %cst_64 [2] : vector<1x8x8xf32> to vector<1x8xf32>
    %260 = vector.shape_cast %259 : vector<1x8xf32> to vector<1x8x1xf32>
    %261 = vector.broadcast %260 : vector<1x8x1xf32> to vector<1x8x8xf32>
    %262 = arith.subf %258, %261 : vector<1x8x8xf32>
    %263 = math.exp %262 : vector<1x8x8xf32>
    %cst_65 = arith.constant dense<0.000000e+00> : vector<1x8xf32>
    %264 = vector.multi_reduction <add>, %263, %cst_65 [2] : vector<1x8x8xf32> to vector<1x8xf32>
    %265 = vector.shape_cast %264 : vector<1x8xf32> to vector<1x8x1xf32>
    %266 = tpu.reciprocal %265 {approx = true} : vector<1x8x1xf32> -> vector<1x8x1xf32>
    %267 = vector.broadcast %266 : vector<1x8x1xf32> to vector<1x8x8xf32>
    %268 = arith.mulf %263, %267 : vector<1x8x8xf32>
    %269 = arith.truncf %268 : vector<1x8x8xf32> to vector<1x8x8xbf16>
    "tpu.trace_start"() <{level = 10 : i32, message = "bts,bsf->btf"}> : () -> ()
    %cst_66 = arith.constant dense<0.000000e+00> : vector<1x8x32xf32>
    %270 = tpu.matmul %269, %257, %cst_66 {dimension_numbers = #tpu.dot_dimension_numbers<[2], [1], [1], [2], [0, 0, 0, 1, 1, 2], [0], [0]>} : vector<1x8x8xbf16>, vector<1x8x32xbf16>, vector<1x8x32xf32> -> vector<1x8x32xf32>
    "tpu.trace_stop"() : () -> ()
    %271 = vector.shape_cast %270 : vector<1x8x32xf32> to vector<8x32xf32>
    %272 = arith.addf %225, %271 : vector<8x32xf32>
    %cst_67 = arith.constant dense<0.000000e+00> : vector<8xf32>
    %273 = vector.multi_reduction <add>, %272, %cst_67 [1] : vector<8x32xf32> to vector<8xf32>
    %274 = vector.shape_cast %273 : vector<8xf32> to vector<8x1xf32>
    %cst_68 = arith.constant 3.200000e+01 : f32
    %275 = vector.broadcast %cst_68 : f32 to vector<8x1xf32>
    %276 = arith.divf %274, %275 : vector<8x1xf32>
    %277 = vector.broadcast %276 : vector<8x1xf32> to vector<8x32xf32>
    %278 = arith.subf %272, %277 : vector<8x32xf32>
    %279 = arith.mulf %278, %278 : vector<8x32xf32>
    %cst_69 = arith.constant dense<0.000000e+00> : vector<8xf32>
    %280 = vector.multi_reduction <add>, %279, %cst_69 [1] : vector<8x32xf32> to vector<8xf32>
    %281 = vector.shape_cast %280 : vector<8xf32> to vector<8x1xf32>
    %cst_70 = arith.constant 3.200000e+01 : f32
    %282 = vector.broadcast %cst_70 : f32 to vector<8x1xf32>
    %283 = arith.divf %281, %282 : vector<8x1xf32>
    %284 = vector.broadcast %276 : vector<8x1xf32> to vector<8x32xf32>
    %285 = arith.subf %272, %284 : vector<8x32xf32>
    %cst_71 = arith.constant 9.99999974E-6 : f32
    %286 = vector.broadcast %cst_71 : f32 to vector<8x1xf32>
    %287 = arith.addf %283, %286 : vector<8x1xf32>
    %288 = math.rsqrt %287 : vector<8x1xf32>
    %289 = vector.broadcast %288 : vector<8x1xf32> to vector<8x32xf32>
    %290 = arith.mulf %285, %289 : vector<8x32xf32>
    %291 = vector.broadcast %240 : vector<1x32xf32> to vector<8x32xf32>
    %292 = arith.mulf %290, %291 : vector<8x32xf32>
    %293 = vector.broadcast %242 : vector<1x32xf32> to vector<8x32xf32>
    %294 = arith.addf %292, %293 : vector<8x32xf32>
    %295 = arith.truncf %294 : vector<8x32xf32> to vector<8x32xbf16>
    %cst_72 = arith.constant dense<0.000000e+00> : vector<8x32xf32>
    %296 = tpu.matmul %295, %234, %cst_72 {dimension_numbers = #tpu.dot_dimension_numbers<[1], [0], [0], [1], [0, 0, 1, 1], [], []>} : vector<8x32xbf16>, vector<32x32xbf16>, vector<8x32xf32> -> vector<8x32xf32>
    %cst_73 = arith.constant 0.000000e+00 : f32
    %297 = vector.broadcast %cst_73 : f32 to vector<8x32xf32>
    %298 = arith.maximumf %296, %297 : vector<8x32xf32>
    %299 = arith.truncf %298 : vector<8x32xf32> to vector<8x32xbf16>
    %cst_74 = arith.constant dense<0.000000e+00> : vector<8x32xf32>
    %300 = tpu.matmul %299, %236, %cst_74 {dimension_numbers = #tpu.dot_dimension_numbers<[1], [0], [0], [1], [0, 0, 1, 1], [], []>} : vector<8x32xbf16>, vector<32x32xbf16>, vector<8x32xf32> -> vector<8x32xf32>
    %301 = arith.addf %294, %300 : vector<8x32xf32>
    %cst_75 = arith.constant dense<0.000000e+00> : vector<8xf32>
    %302 = vector.multi_reduction <add>, %301, %cst_75 [1] : vector<8x32xf32> to vector<8xf32>
    %303 = vector.shape_cast %302 : vector<8xf32> to vector<8x1xf32>
    %cst_76 = arith.constant 3.200000e+01 : f32
    %304 = vector.broadcast %cst_76 : f32 to vector<8x1xf32>
    %305 = arith.divf %303, %304 : vector<8x1xf32>
    %306 = vector.broadcast %305 : vector<8x1xf32> to vector<8x32xf32>
    %307 = arith.subf %301, %306 : vector<8x32xf32>
    %308 = arith.mulf %307, %307 : vector<8x32xf32>
    %cst_77 = arith.constant dense<0.000000e+00> : vector<8xf32>
    %309 = vector.multi_reduction <add>, %308, %cst_77 [1] : vector<8x32xf32> to vector<8xf32>
    %310 = vector.shape_cast %309 : vector<8xf32> to vector<8x1xf32>
    %cst_78 = arith.constant 3.200000e+01 : f32
    %311 = vector.broadcast %cst_78 : f32 to vector<8x1xf32>
    %312 = arith.divf %310, %311 : vector<8x1xf32>
    %313 = vector.broadcast %305 : vector<8x1xf32> to vector<8x32xf32>
    %314 = arith.subf %301, %313 : vector<8x32xf32>
    %cst_79 = arith.constant 9.99999974E-6 : f32
    %315 = vector.broadcast %cst_79 : f32 to vector<8x1xf32>
    %316 = arith.addf %312, %315 : vector<8x1xf32>
    %317 = math.rsqrt %316 : vector<8x1xf32>
    %318 = vector.broadcast %317 : vector<8x1xf32> to vector<8x32xf32>
    %319 = arith.mulf %314, %318 : vector<8x32xf32>
    %320 = vector.broadcast %244 : vector<1x32xf32> to vector<8x32xf32>
    %321 = arith.mulf %319, %320 : vector<8x32xf32>
    %322 = vector.broadcast %246 : vector<1x32xf32> to vector<8x32xf32>
    %323 = arith.addf %321, %322 : vector<8x32xf32>
    %324 = arith.truncf %323 : vector<8x32xf32> to vector<8x32xbf16>
    %cst_80 = arith.constant dense<0.000000e+00> : vector<8x32xf32>
    %325 = tpu.matmul %324, %238, %cst_80 {dimension_numbers = #tpu.dot_dimension_numbers<[1], [0], [0], [1], [0, 0, 1, 1], [], []>} : vector<8x32xbf16>, vector<32x32xbf16>, vector<8x32xf32> -> vector<8x32xf32>
    %cst_81 = arith.constant 3.000000e-01 : f32
    %326 = vector.broadcast %cst_81 : f32 to vector<8x32xf32>
    %327 = arith.mulf %326, %323 : vector<8x32xf32>
    %328 = arith.addf %219, %327 : vector<8x32xf32>
    %cst_82 = arith.constant 3.000000e-01 : f32
    %329 = vector.broadcast %cst_82 : f32 to vector<8x32xf32>
    %330 = arith.mulf %329, %325 : vector<8x32xf32>
    %331 = arith.addf %222, %330 : vector<8x32xf32>
    %332 = vector.shape_cast %331 : vector<8x32xf32> to vector<1x8x32xf32>
    %c0_83 = arith.constant 0 : index
    %c0_84 = arith.constant 0 : index
    %c0_85 = arith.constant 0 : index
    %333 = vector.load %arg6[%c0_83, %c0_84, %c0_85] : memref<1x8x32xf32, #tpu.memory_space<vmem>>, vector<1x8x32xf32>
    tpu.vector_store %arg6[%c0_83, %c0_84, %c0_85], %332 {strides = array<i32>} : memref<1x8x32xf32, #tpu.memory_space<vmem>>, vector<1x8x32xf32>,
    %334 = arith.truncf %328 : vector<8x32xf32> to vector<8x32xbf16>
    %c0_86 = arith.constant 0 : index
    %c0_87 = arith.constant 0 : index
    %335 = vector.load %arg4[%c0_86, %c0_87] : memref<32x128xbf16, #tpu.memory_space<vmem>>, vector<32x128xbf16>
    %cst_88 = arith.constant dense<0.000000e+00> : vector<8x128xf32>
    %336 = tpu.matmul %334, %335, %cst_88 {dimension_numbers = #tpu.dot_dimension_numbers<[1], [0], [0], [1], [0, 0, 1, 1], [], []>} : vector<8x32xbf16>, vector<32x128xbf16>, vector<8x128xf32> -> vector<8x128xf32>
    %c0_89 = arith.constant 0 : index
    %c0_90 = arith.constant 0 : index
    %337 = vector.load %arg5[%c0_89, %c0_90] : memref<1x128xf32, #tpu.memory_space<vmem>>, vector<1x128xf32>
    %338 = vector.broadcast %337 : vector<1x128xf32> to vector<8x128xf32>
    %339 = arith.addf %336, %338 : vector<8x128xf32>
    %340 = vector.shape_cast %339 : vector<8x128xf32> to vector<1x8x128xf32>
    %341 = arith.truncf %340 : vector<1x8x128xf32> to vector<1x8x128xbf16>
    %c0_91 = arith.constant 0 : index
    %c0_92 = arith.constant 0 : index
    %c0_93 = arith.constant 0 : index
    %342 = vector.load %arg7[%c0_91, %c0_92, %c0_93] : memref<1x8x128xbf16, #tpu.memory_space<vmem>>, vector<1x8x128xbf16>
    tpu.vector_store %arg7[%c0_91, %c0_92, %c0_93], %341 {strides = array<i32>} : memref<1x8x128xbf16, #tpu.memory_space<vmem>>, vector<1x8x128xbf16>,
    return
  }
  func.func @transform_0(%arg0: i32) -> (i32, i32, i32, i32) {
    %c0_i32 = arith.constant 0 : i32
    %c0_i32_0 = arith.constant 0 : i32
    %c0_i32_1 = arith.constant 0 : i32
    %c0_i32_2 = arith.constant 0 : i32
    return %arg0, %c0_i32, %c0_i32_0, %c0_i32_1 : i32, i32, i32, i32
  }
  func.func @transform_1(%arg0: i32) -> (i32, i32, i32, i32) {
    %c0_i32 = arith.constant 0 : i32
    %c0_i32_0 = arith.constant 0 : i32
    %c0_i32_1 = arith.constant 0 : i32
    %c0_i32_2 = arith.constant 0 : i32
    %c0_i32_3 = arith.constant 0 : i32
    return %c0_i32, %c0_i32_0, %c0_i32_1, %c0_i32_2 : i32, i32, i32, i32
  }
  func.func @transform_2(%arg0: i32) -> (i32, i32, i32) {
    %c0_i32 = arith.constant 0 : i32
    %c0_i32_0 = arith.constant 0 : i32
    %c0_i32_1 = arith.constant 0 : i32
    %c0_i32_2 = arith.constant 0 : i32
    return %c0_i32, %c0_i32_0, %c0_i32_1 : i32, i32, i32
  }
  func.func @transform_3(%arg0: i32) -> (i32, i32) {
    %c0_i32 = arith.constant 0 : i32
    %c0_i32_0 = arith.constant 0 : i32
    %c0_i32_1 = arith.constant 0 : i32
    return %c0_i32, %c0_i32_0 : i32, i32
  }
  func.func @transform_4(%arg0: i32) -> (i32, i32) {
    %c0_i32 = arith.constant 0 : i32
    %c0_i32_0 = arith.constant 0 : i32
    %c0_i32_1 = arith.constant 0 : i32
    return %c0_i32, %c0_i32_0 : i32, i32
  }
  func.func @transform_5(%arg0: i32) -> (i32, i32, i32) {
    %c0_i32 = arith.constant 0 : i32
    %c0_i32_0 = arith.constant 0 : i32
    %c0_i32_1 = arith.constant 0 : i32
    return %arg0, %c0_i32, %c0_i32_0 : i32, i32, i32
  }
  func.func @transform_6(%arg0: i32) -> (i32, i32, i32) {
    %c0_i32 = arith.constant 0 : i32
    %c0_i32_0 = arith.constant 0 : i32
    %c0_i32_1 = arith.constant 0 : i32
    return %arg0, %c0_i32, %c0_i32_0 : i32, i32, i32
  }
}

</mosaic_0001>

<llo_original>
// kernel: tpu_custom_call.1
$region0: #{tpu_custom_call.1}
  #allocation0 [shape = 'u32[]', space=smem, size = 0x4, offset = 0x4, fixed_abs, tag = 'smem constant byte address 0x4 - core index']
  #allocation1 [shape = 'u32[144,128]{1,0:T(1,128)}', space=vmem, size = 0x12000, scoped, tag = 'internal scratch']
  %s0 = inlined_call_operand.hbm [shape: f32[2,3,8,32], index: 0, kind: input, shape index: {}]
  %s1 = inlined_call_operand.hbm [shape: bf16[3,6,32,32], index: 1, kind: input, shape index: {}]
  %s2 = inlined_call_operand.hbm [shape: f32[3,4,32], index: 2, kind: input, shape index: {}]
  %s3 = inlined_call_operand.hbm [shape: bf16[32,128], index: 3, kind: input, shape index: {}]
  %s4 = inlined_call_operand.vmem [shape: f32[1,128], index: 4, kind: input, shape index: {}]
  %s5 = inlined_call_operand.hbm [shape: f32[2,8,32], index: 5, kind: output, shape index: {0}]
  %s6 = inlined_call_operand.hbm [shape: bf16[2,8,128], index: 6, kind: output, shape index: {1}]
  %7 = xla_tuple %s5, %s6
  %s8 = sld [smem:[#allocation0]]
  $region77: #{tpu_custom_call.1} parent=0
    _
  %s10 = ssub.s32 1, %s8
  %s11 = scalar_select 0, %s10, %s8
  $region1: #{tpu_custom_call.1} parent=0
    #allocation2 [shape = 'u8[24576]{0}', space=vmem, size = 0x6000, scoped, tag = 'input window, operand 0']
    #allocation3 [shape = 's32[2]{0}', space=sflag, size = 0x8, scoped, tag = 'scoped memory for tpu_custom_call.1']
    #allocation4 [shape = 's32[2]{0}', space=sflag, size = 0x8, scoped, tag = 'scoped memory for tpu_custom_call.1']
    #allocation5 [shape = 'u8[147456]{0}', space=vmem, size = 0x24000, scoped, tag = 'input window, operand 1, single buffered']
    #allocation6 [shape = 's32[1]{0}', space=sflag, size = 0x4, scoped, tag = 'scoped memory for tpu_custom_call.1']
    #allocation7 [shape = 'u8[6144]{0}', space=vmem, size = 0x1800, scoped, tag = 'input window, operand 2, single buffered']
    #allocation8 [shape = 'u8[8192]{0}', space=vmem, size = 0x2000, scoped, tag = 'input window, operand 3, single buffered']
    #allocation9 [shape = 's32[1]{0}', space=sflag, size = 0x4, scoped, tag = 'scoped memory for tpu_custom_call.1']
    #allocation10 [shape = 'u8[8192]{0}', space=vmem, size = 0x2000, scoped, tag = 'output window, operand 0']
    #allocation11 [shape = 'u8[4096]{0}', space=vmem, size = 0x1000, scoped, tag = 'output window, operand 1']
    #allocation12 [shape = 's32[2]{0}', space=sflag, size = 0x8, scoped, tag = 'scoped memory for tpu_custom_call.1']
    %12 = vsyncpa [#allocation3], 0
    %s13 = scalar_lea.sflag [#allocation3], 1
    %14 = vsyncpa %s13, 0
    %15 = vsyncpa [#allocation6], 0
    %16 = vsyncpa [#allocation9], 0
    %17 = vsyncpa [#allocation4], 0
    %s18 = scalar_lea.sflag [#allocation4], 1
    %19 = vsyncpa %s18, 0
    %20 = vsyncpa [#allocation12], 0
    %s21 = scalar_lea.sflag [#allocation12], 1
    %22 = vsyncpa %s21, 0
    loop: start=0, step=1, limit=4
    $region2: #{tpu_custom_call.1} parent=1 // loop_pre_header
      _
    $region3: #{tpu_custom_call.1} parent=1 // loop_header
      %s24 = sphi 0, %s28
      %p25 = scmp.ge.s32.totalorder %s24, 4
      %s34 = sphi 0, %s36
      %s37 = sphi 0, %s34
      %s38 = sphi 0, %s37
      %s54 = sphi 0, %s38
      %s58 = sphi 0, %s58
      %s60 = sphi 0, %s58
      %s61 = sphi 0, %s60
      %s75 = sphi 0, %s61
      %s79 = sphi 0, %s79
      %s81 = sphi 0, %s79
      %s82 = sphi 0, %s81
      %s96 = sphi 0, %s82
      %s100 = sphi 0, %s100
      %s102 = sphi 0, %s100
      %s103 = sphi 0, %s102
      %s117 = sphi 0, %s103
      %s121 = sphi 0, %s121
      %s123 = sphi 0, %s121
      %s124 = sphi 0, %s123
      %s138 = sphi 0, %s124
      %s144 = sphi 0, %s146
      %s147 = sphi 0, %s144
      %s148 = sphi 0, %s147
      %s164 = sphi 0, %s148
      %s170 = sphi 0, %s172
      %s173 = sphi 0, %s170
      %s174 = sphi 0, %s173
      %s190 = sphi 0, %s174
    $region4: #{tpu_custom_call.1} parent=1 // loop_header_branch
      %27 = sbr.rel (%p25) target = $region8
    $region5: #{tpu_custom_call.1} parent=1 // loop_body
      %s29 = ssub.s32 %s24, 1
      %s30 = ssub.s32 %s24, 2
      %s31 = sadd.s32 %s24, 1
      %s32 = ssub.s32 %s24, %s31
      %p33 = scmp.eq.s32.totalorder %s32, 0
      %s35 = sadd.s32 %s34, 1
      %s36 = scalar_select %p33, %s34, %s35
      %p39 = pneg %p33
      %p40 = scmp.eq.s32.totalorder %s24, 1
      %p41 = por %p39, %p40
      %p42 = scmp.ne.s32.totalorder %s34, %s37
      %p43 = scmp.eq.s32.totalorder %s24, 0
      %p44 = por %p42, %p43
      %p45 = scmp.ne.s32.totalorder %s34, %s37
      %p46 = scmp.eq.s32.totalorder %s29, 1
      %p47 = por %p45, %p46
      %p48 = scmp.ne.s32.totalorder %s37, %s38
      %p49 = scmp.eq.s32.totalorder %s29, 0
      %p50 = por %p48, %p49
      %p51 = scmp.ne.s32.totalorder %s37, %s38
      %p52 = scmp.eq.s32.totalorder %s30, 1
      %p53 = por %p51, %p52
      %p55 = scmp.ne.s32.totalorder %s38, %s54
      %p56 = scmp.eq.s32.totalorder %s30, 0
      %p57 = por %p55, %p56
      %s59 = sadd.s32 %s58, 1
      %p62 = scmp.eq.s32.totalorder %s24, 1
      %p63 = scmp.ne.s32.totalorder %s58, %s60
      %p64 = scmp.eq.s32.totalorder %s24, 0
      %p65 = por %p63, %p64
      %p66 = scmp.ne.s32.totalorder %s58, %s60
      %p67 = scmp.eq.s32.totalorder %s29, 1
      %p68 = por %p66, %p67
      %p69 = scmp.ne.s32.totalorder %s60, %s61
      %p70 = scmp.eq.s32.totalorder %s29, 0
      %p71 = por %p69, %p70
      %p72 = scmp.ne.s32.totalorder %s60, %s61
      %p73 = scmp.eq.s32.totalorder %s30, 1
      %p74 = por %p72, %p73
      %p76 = scmp.ne.s32.totalorder %s61, %s75
      %p77 = scmp.eq.s32.totalorder %s30, 0
      %p78 = por %p76, %p77
      %s80 = sadd.s32 %s79, 1
      %p83 = scmp.eq.s32.totalorder %s24, 1
      %p84 = scmp.ne.s32.totalorder %s79, %s81
      %p85 = scmp.eq.s32.totalorder %s24, 0
      %p86 = por %p84, %p85
      %p87 = scmp.ne.s32.totalorder %s79, %s81
      %p88 = scmp.eq.s32.totalorder %s29, 1
      %p89 = por %p87, %p88
      %p90 = scmp.ne.s32.totalorder %s81, %s82
      %p91 = scmp.eq.s32.totalorder %s29, 0
      %p92 = por %p90, %p91
      %p93 = scmp.ne.s32.totalorder %s81, %s82
      %p94 = scmp.eq.s32.totalorder %s30, 1
      %p95 = por %p93, %p94
      %p97 = scmp.ne.s32.totalorder %s82, %s96
      %p98 = scmp.eq.s32.totalorder %s30, 0
      %p99 = por %p97, %p98
      %s101 = sadd.s32 %s100, 1
      %p104 = scmp.eq.s32.totalorder %s24, 1
      %p105 = scmp.ne.s32.totalorder %s100, %s102
      %p106 = scmp.eq.s32.totalorder %s24, 0
      %p107 = por %p105, %p106
      %p108 = scmp.ne.s32.totalorder %s100, %s102
      %p109 = scmp.eq.s32.totalorder %s29, 1
      %p110 = por %p108, %p109
      %p111 = scmp.ne.s32.totalorder %s102, %s103
      %p112 = scmp.eq.s32.totalorder %s29, 0
      %p113 = por %p111, %p112
      %p114 = scmp.ne.s32.totalorder %s102, %s103
      %p115 = scmp.eq.s32.totalorder %s30, 1
      %p116 = por %p114, %p115
      %p118 = scmp.ne.s32.totalorder %s103, %s117
      %p119 = scmp.eq.s32.totalorder %s30, 0
      %p120 = por %p118, %p119
      %s122 = sadd.s32 %s121, 1
      %p125 = scmp.eq.s32.totalorder %s24, 1
      %p126 = scmp.ne.s32.totalorder %s121, %s123
      %p127 = scmp.eq.s32.totalorder %s24, 0
      %p128 = por %p126, %p127
      %p129 = scmp.ne.s32.totalorder %s121, %s123
      %p130 = scmp.eq.s32.totalorder %s29, 1
      %p131 = por %p129, %p130
      %p132 = scmp.ne.s32.totalorder %s123, %s124
      %p133 = scmp.eq.s32.totalorder %s29, 0
      %p134 = por %p132, %p133
      %p135 = scmp.ne.s32.totalorder %s123, %s124
      %p136 = scmp.eq.s32.totalorder %s30, 1
      %p137 = por %p135, %p136
      %p139 = scmp.ne.s32.totalorder %s124, %s138
      %p140 = scmp.eq.s32.totalorder %s30, 0
      %p141 = por %p139, %p140
      %s142 = ssub.s32 %s24, %s31
      %p143 = scmp.eq.s32.totalorder %s142, 0
      %s145 = sadd.s32 %s144, 1
      %s146 = scalar_select %p143, %s144, %s145
      %p149 = pneg %p143
      %p150 = scmp.eq.s32.totalorder %s24, 1
      %p151 = por %p149, %p150
      %p152 = scmp.ne.s32.totalorder %s144, %s147
      %p153 = scmp.eq.s32.totalorder %s24, 0
      %p154 = por %p152, %p153
      %p155 = scmp.ne.s32.totalorder %s144, %s147
      %p156 = scmp.eq.s32.totalorder %s29, 1
      %p157 = por %p155, %p156
      %p158 = scmp.ne.s32.totalorder %s147, %s148
      %p159 = scmp.eq.s32.totalorder %s29, 0
      %p160 = por %p158, %p159
      %p161 = scmp.ne.s32.totalorder %s147, %s148
      %p162 = scmp.eq.s32.totalorder %s30, 1
      %p163 = por %p161, %p162
      %p165 = scmp.ne.s32.totalorder %s148, %s164
      %p166 = scmp.eq.s32.totalorder %s30, 0
      %p167 = por %p165, %p166
      %s168 = ssub.s32 %s24, %s31
      %p169 = scmp.eq.s32.totalorder %s168, 0
      %s171 = sadd.s32 %s170, 1
      %s172 = scalar_select %p169, %s170, %s171
      %p175 = pneg %p169
      %p176 = scmp.eq.s32.totalorder %s24, 1
      %p177 = por %p175, %p176
      %p178 = scmp.ne.s32.totalorder %s170, %s173
      %p179 = scmp.eq.s32.totalorder %s24, 0
      %p180 = por %p178, %p179
      %p181 = scmp.ne.s32.totalorder %s170, %s173
      %p182 = scmp.eq.s32.totalorder %s29, 1
      %p183 = por %p181, %p182
      %p184 = scmp.ne.s32.totalorder %s173, %s174
      %p185 = scmp.eq.s32.totalorder %s29, 0
      %p186 = por %p184, %p185
      %p187 = scmp.ne.s32.totalorder %s173, %s174
      %p188 = scmp.eq.s32.totalorder %s30, 1
      %p189 = por %p187, %p188
      %p191 = scmp.ne.s32.totalorder %s174, %s190
      %p192 = scmp.eq.s32.totalorder %s30, 0
      %p193 = por %p191, %p192
      %p194 = scmp.le.s32.totalorder 1, %s24
      %p195 = scmp.lt.s32.totalorder %s24, 3
      %p196 = pnand %p194, %p195
      %p197 = pneg %p196
      // Predicated region
      $region9: #{tpu_custom_call.1} parent=5 // pred_check
        _
      $region10: #{tpu_custom_call.1} parent=5 // pred_check_branch
        %199 = sbr.rel (%p196) target = $region12
      $region11: #{tpu_custom_call.1} parent=5 // pred_region
        %s200 = ssub.s32 %s24, 1
        // Predicated region
        $region13: #{tpu_custom_call.1} parent=11 // pred_check
          %p201 = pneg %p71
        $region14: #{tpu_custom_call.1} parent=11 // pred_check_branch
          %203 = sbr.rel (%p201) target = $region16
        $region15: #{tpu_custom_call.1} parent=11 // pred_region
          %s205 = ssub.s32 4608, 4608
          %206 = vsyncadd [#allocation6], %s205
          %s207 = sshll.u32 [#allocation5], 4
          %s208 = int_to_ptr.vmem [resolvable:$true] %s207
          %213 = dma.hbm_to_vmem [thread:$0]  %s1, 4608, %s208, [#allocation6], 64, 64, 4
        $region16: #{tpu_custom_call.1} parent=11 // pred_fallthru
          _
        // Predicated region
        $region17: #{tpu_custom_call.1} parent=11 // pred_check
          %p214 = pneg %p92
        $region18: #{tpu_custom_call.1} parent=11 // pred_check_branch
          %216 = sbr.rel (%p214) target = $region20
        $region19: #{tpu_custom_call.1} parent=11 // pred_region
          %s218 = ssub.s32 192, 192
          %219 = vsyncadd [#allocation6], %s218
          %s220 = sshll.u32 [#allocation7], 4
          %s221 = int_to_ptr.vmem [resolvable:$true] %s220
          %226 = dma.hbm_to_vmem [thread:$0]  %s2, 192, %s221, [#allocation6], 64, 64, 4
        $region20: #{tpu_custom_call.1} parent=11 // pred_fallthru
          _
        // Predicated region
        $region21: #{tpu_custom_call.1} parent=11 // pred_check
          %p227 = pneg %p113
        $region22: #{tpu_custom_call.1} parent=11 // pred_check_branch
          %229 = sbr.rel (%p227) target = $region24
        $region23: #{tpu_custom_call.1} parent=11 // pred_region
          %s231 = ssub.s32 256, 256
          %232 = vsyncadd [#allocation9], %s231
          %s233 = sshll.u32 [#allocation8], 4
          %s234 = int_to_ptr.vmem [resolvable:$true] %s233
          %239 = dma.hbm_to_vmem [thread:$0]  %s3, 256, %s234, [#allocation9], 64, 64, 4
        $region24: #{tpu_custom_call.1} parent=11 // pred_fallthru
          _
        // Predicated region
        $region25: #{tpu_custom_call.1} parent=11 // pred_check
          %p240 = pneg %p134
        $region26: #{tpu_custom_call.1} parent=11 // pred_check_branch
          %242 = sbr.rel (%p240) target = $region28
        $region27: #{tpu_custom_call.1} parent=11 // pred_region
          _
        $region28: #{tpu_custom_call.1} parent=11 // pred_fallthru
          _
      $region12: #{tpu_custom_call.1} parent=5 // pred_fallthru
        _
      %p243 = scmp.lt.s32.totalorder %s24, 2
      // Predicated region
      $region29: #{tpu_custom_call.1} parent=5 // pred_check
        %p244 = pneg %p243
      $region30: #{tpu_custom_call.1} parent=5 // pred_check_branch
        %246 = sbr.rel (%p244) target = $region32
      $region31: #{tpu_custom_call.1} parent=5 // pred_region
        // Predicated region
        $region33: #{tpu_custom_call.1} parent=31 // pred_check
          %p247 = pneg %p44
        $region34: #{tpu_custom_call.1} parent=31 // pred_check_branch
          %249 = sbr.rel (%p247) target = $region36
        $region35: #{tpu_custom_call.1} parent=31 // pred_region
          %s250 = sand.u32 %s34, 1
          %s251 = scalar_lea.sflag [#allocation3], %s250
          %s252 = sand.u32 %s34, 1
          %s253 = smul.addr %s252, 24
          %s254 = scalar_lea.vmem [#allocation2], %s253
          %s256 = ssub.s32 384, 384
          %257 = vsyncadd %s251, %s256
          %s258 = smul.addr %s24, 3
          %s259 = smul.addr %s258, 128
          %s260 = scalar_lea.hbm %s0, %s259
          %s261 = sshll.u32 %s254, 4
          %s262 = int_to_ptr.vmem [resolvable:$true] %s261
          %267 = dma.hbm_to_vmem [thread:$0]  %s260, 384, %s262, %s251, 128, 128, 8
        $region36: #{tpu_custom_call.1} parent=31 // pred_fallthru
          _
      $region32: #{tpu_custom_call.1} parent=5 // pred_fallthru
        _
      %p268 = scmp.le.s32.totalorder 1, %s24
      %p269 = scmp.lt.s32.totalorder %s24, 3
      %p270 = pnand %p268, %p269
      %p271 = pneg %p270
      // Predicated region
      $region37: #{tpu_custom_call.1} parent=5 // pred_check
        _
      $region38: #{tpu_custom_call.1} parent=5 // pred_check_branch
        %273 = sbr.rel (%p270) target = $region40
      $region39: #{tpu_custom_call.1} parent=5 // pred_region
        %s274 = ssub.s32 %s24, 1
        %s275 = sand.u32 %s37, 1
        %s276 = scalar_lea.sflag [#allocation3], %s275
        %s277 = sand.u32 %s37, 1
        %s278 = smul.addr %s277, 24
        %s279 = scalar_lea.vmem [#allocation2], %s278
        // Predicated region
        $region41: #{tpu_custom_call.1} parent=39 // pred_check
          %p280 = pneg %p50
        $region42: #{tpu_custom_call.1} parent=39 // pred_check_branch
          %282 = sbr.rel (%p280) target = $region44
        $region43: #{tpu_custom_call.1} parent=39 // pred_region
          %283 = dma.done %s276, 384
        $region44: #{tpu_custom_call.1} parent=39 // pred_fallthru
          _
        // Predicated region
        $region45: #{tpu_custom_call.1} parent=39 // pred_check
          %p284 = pneg %p71
        $region46: #{tpu_custom_call.1} parent=39 // pred_check_branch
          %286 = sbr.rel (%p284) target = $region48
        $region47: #{tpu_custom_call.1} parent=39 // pred_region
          %287 = dma.done [#allocation6], 4608
        $region48: #{tpu_custom_call.1} parent=39 // pred_fallthru
          _
        // Predicated region
        $region49: #{tpu_custom_call.1} parent=39 // pred_check
          %p288 = pneg %p92
        $region50: #{tpu_custom_call.1} parent=39 // pred_check_branch
          %290 = sbr.rel (%p288) target = $region52
        $region51: #{tpu_custom_call.1} parent=39 // pred_region
          %291 = dma.done [#allocation6], 192
        $region52: #{tpu_custom_call.1} parent=39 // pred_fallthru
          _
        // Predicated region
        $region53: #{tpu_custom_call.1} parent=39 // pred_check
          %p292 = pneg %p113
        $region54: #{tpu_custom_call.1} parent=39 // pred_check_branch
          %294 = sbr.rel (%p292) target = $region56
        $region55: #{tpu_custom_call.1} parent=39 // pred_region
          %295 = dma.done [#allocation9], 256
        $region56: #{tpu_custom_call.1} parent=39 // pred_fallthru
          _
        %s296 = sand.u32 %s37, 1
        %s297 = scalar_lea.sflag [#allocation3], %s296
        %s298 = sand.u32 %s37, 1
        %s299 = smul.addr %s298, 24
        %s300 = scalar_lea.vmem [#allocation2], %s299
        %p301 = pneg %p50
        %p302 = pneg %p47
        %p303 = pneg %p71
        %p304 = pneg %p68
        %p305 = pneg %p92
        %p306 = pneg %p89
        %p307 = pneg %p113
        %p308 = pneg %p110
        %p309 = pneg %p134
        %p310 = pneg %p131
        %p311 = pneg %p160
        %p312 = pneg %p157
        %s313 = sand.u32 %s147, 1
        %s314 = scalar_lea.sflag [#allocation4], %s313
        %s315 = sand.u32 %s147, 1
        %s316 = smul.addr %s315, 8
        %s317 = scalar_lea.vmem [#allocation10], %s316
        %p318 = pneg %p186
        %p319 = pneg %p183
        %s320 = sand.u32 %s173, 1
        %s321 = scalar_lea.sflag [#allocation12], %s320
        %s322 = sand.u32 %s173, 1
        %s323 = smul.addr %s322, 4
        %s324 = scalar_lea.vmem [#allocation11], %s323
        %v326 = vld [vmem:[%s279] sm:$0xff]
        %v327 = vld [vmem:[%s279 + $0x8] sm:$0xff]
        %v328 = vld [vmem:[%s279 + $0x10] sm:$0xff]
        %v329 = vld [vmem:[#allocation5] sm:$0xf]
        %v330 = vld [vmem:[#allocation5 + $0x4] sm:$0xf]
        %v331 = vld [vmem:[#allocation5 + $0x8] sm:$0xf]
        %v332 = vld [vmem:[#allocation5 + $0xc] sm:$0xf]
        %v333 = vld [vmem:[#allocation5 + $0x10] sm:$0xf]
        %v334 = vld [vmem:[#allocation5 + $0x14] sm:$0xf]
        %v335 = vld [vmem:[#allocation5 + $0x18] sm:$0xf]
        %v336 = vld [vmem:[#allocation5 + $0x1c] sm:$0xf]
        %v337 = vld [vmem:[#allocation5 + $0x20] sm:$0xf]
        %v338 = vld [vmem:[#allocation5 + $0x24] sm:$0xf]
        %v339 = vld [vmem:[#allocation5 + $0x28] sm:$0xf]
        %v340 = vld [vmem:[#allocation5 + $0x2c] sm:$0xf]
        %v341 = vld [vmem:[#allocation5 + $0x30] sm:$0xf]
        %v342 = vld [vmem:[#allocation5 + $0x34] sm:$0xf]
        %v343 = vld [vmem:[#allocation5 + $0x38] sm:$0xf]
        %v344 = vld [vmem:[#allocation5 + $0x3c] sm:$0xf]
        %v345 = vld [vmem:[#allocation5 + $0x40] sm:$0xf]
        %v346 = vld [vmem:[#allocation5 + $0x44] sm:$0xf]
        %v347 = vld [vmem:[#allocation5 + $0x48] sm:$0xf]
        %v348 = vld [vmem:[#allocation5 + $0x4c] sm:$0xf]
        %v349 = vld [vmem:[#allocation5 + $0x50] sm:$0xf]
        %v350 = vld [vmem:[#allocation5 + $0x54] sm:$0xf]
        %v351 = vld [vmem:[#allocation5 + $0x58] sm:$0xf]
        %v352 = vld [vmem:[#allocation5 + $0x5c] sm:$0xf]
        %v353 = vld [vmem:[#allocation5 + $0x60] sm:$0xf]
        %v354 = vld [vmem:[#allocation5 + $0x64] sm:$0xf]
        %v355 = vld [vmem:[#allocation5 + $0x68] sm:$0xf]
        %v356 = vld [vmem:[#allocation5 + $0x6c] sm:$0xf]
        %v357 = vld [vmem:[#allocation5 + $0x70] sm:$0xf]
        %v358 = vld [vmem:[#allocation5 + $0x74] sm:$0xf]
        %v359 = vld [vmem:[#allocation5 + $0x78] sm:$0xf]
        %v360 = vld [vmem:[#allocation5 + $0x7c] sm:$0xf]
        %v361 = vld [vmem:[#allocation5 + $0x80] sm:$0xf]
        %v362 = vld [vmem:[#allocation5 + $0x84] sm:$0xf]
        %v363 = vld [vmem:[#allocation5 + $0x88] sm:$0xf]
        %v364 = vld [vmem:[#allocation5 + $0x8c] sm:$0xf]
        %v365 = vld [vmem:[#allocation5 + $0x90] sm:$0xf]
        %v366 = vld [vmem:[#allocation5 + $0x94] sm:$0xf]
        %v367 = vld [vmem:[#allocation5 + $0x98] sm:$0xf]
        %v368 = vld [vmem:[#allocation5 + $0x9c] sm:$0xf]
        %v369 = vld [vmem:[#allocation5 + $0xa0] sm:$0xf]
        %v370 = vld [vmem:[#allocation5 + $0xa4] sm:$0xf]
        %v371 = vld [vmem:[#allocation5 + $0xa8] sm:$0xf]
        %v372 = vld [vmem:[#allocation5 + $0xac] sm:$0xf]
        %v373 = vld [vmem:[#allocation5 + $0xb0] sm:$0xf]
        %v374 = vld [vmem:[#allocation5 + $0xb4] sm:$0xf]
        %v375 = vld [vmem:[#allocation5 + $0xb8] sm:$0xf]
        %v376 = vld [vmem:[#allocation5 + $0xbc] sm:$0xf]
        %v377 = vld [vmem:[#allocation5 + $0xc0] sm:$0xf]
        %v378 = vld [vmem:[#allocation5 + $0xc4] sm:$0xf]
        %v379 = vld [vmem:[#allocation5 + $0xc8] sm:$0xf]
        %v380 = vld [vmem:[#allocation5 + $0xcc] sm:$0xf]
        %v381 = vld [vmem:[#allocation5 + $0xd0] sm:$0xf]
        %v382 = vld [vmem:[#allocation5 + $0xd4] sm:$0xf]
        %v383 = vld [vmem:[#allocation5 + $0xd8] sm:$0xf]
        %v384 = vld [vmem:[#allocation5 + $0xdc] sm:$0xf]
        %v385 = vld [vmem:[#allocation5 + $0xe0] sm:$0xf]
        %v386 = vld [vmem:[#allocation5 + $0xe4] sm:$0xf]
        %v387 = vld [vmem:[#allocation5 + $0xe8] sm:$0xf]
        %v388 = vld [vmem:[#allocation5 + $0xec] sm:$0xf]
        %v389 = vld [vmem:[#allocation5 + $0xf0] sm:$0xf]
        %v390 = vld [vmem:[#allocation5 + $0xf4] sm:$0xf]
        %v391 = vld [vmem:[#allocation5 + $0xf8] sm:$0xf]
        %v392 = vld [vmem:[#allocation5 + $0xfc] sm:$0xf]
        %v393 = vld [vmem:[#allocation5 + $0x100] sm:$0xf]
        %v394 = vld [vmem:[#allocation5 + $0x104] sm:$0xf]
        %v395 = vld [vmem:[#allocation5 + $0x108] sm:$0xf]
        %v396 = vld [vmem:[#allocation5 + $0x10c] sm:$0xf]
        %v397 = vld [vmem:[#allocation5 + $0x110] sm:$0xf]
        %v398 = vld [vmem:[#allocation5 + $0x114] sm:$0xf]
        %v399 = vld [vmem:[#allocation5 + $0x118] sm:$0xf]
        %v400 = vld [vmem:[#allocation5 + $0x11c] sm:$0xf]
        %v401 = vld [vmem:[#allocation7] sm:$0xf]
        %v402 = vld [vmem:[#allocation7 + $0x4] sm:$0xf]
        %v403 = vld [vmem:[#allocation7 + $0x8] sm:$0xf]
        %v404 = vpack.c.bf16 %v326, %v326
        %v409 = vunpack.c.l.b16 %v329
        %v410 = vunpack.c.l.b16 %v330
        %v411 = vunpack.c.l.b16 %v331
        %v412 = vunpack.c.l.b16 %v332
        %v413 = vpack.c.b16 %v410, %v409
        %v414 = vpack.c.b16 %v412, %v411
        %vm417 = vcmask 261120
        %v419 = vsel %vm417, %v404, 0
        %421 = vmatprep.subr.bf16.mxu0 0
        %422 = vmatpush1.bf16.msra.mxu0 0
        %423 = vmatprep.subr.bf16.mxu0 0
        %424 = vmatpush1.bf16.msra.mxu0 0
        %425 = vmatprep.subr.bf16.mxu0 0
        %426 = vmatpush1.bf16.msra.mxu0 0
        %427 = vmatprep.subr.bf16.mxu0 0
        %428 = vmatpush1.bf16.msra.mxu0 0
        %429 = vmatprep.subr.bf16.mxu0 0
        %430 = vmatpush1.bf16.msra.mxu0 0
        %431 = vmatprep.subr.bf16.mxu0 0
        %432 = vmatpush1.bf16.msra.mxu0 0
        %433 = vmatprep.subr.bf16.mxu0 0
        %434 = vmatpush1.bf16.msra.mxu0 %v414
        %435 = vmatprep.subr.bf16.mxu0 0
        %436 = vmatpush1.bf16.msra.mxu0 %v413
        %437 = vmatprep.subr.bf16.mxu0 0
        %438 = vmatpush2.bf16.msra.mxu0 0
        %439 = vmatprep.subr.bf16.mxu0 0
        %440 = vmatpush2.bf16.msra.mxu0 0
        %441 = vmatprep.subr.bf16.mxu0 0
        %442 = vmatpush2.bf16.msra.mxu0 0
        %443 = vmatprep.subr.bf16.mxu0 0
        %444 = vmatpush2.bf16.msra.mxu0 0
        %445 = vmatprep.subr.bf16.mxu0 0
        %446 = vmatpush2.bf16.msra.mxu0 0
        %447 = vmatprep.subr.bf16.mxu0 0
        %448 = vmatpush2.bf16.msra.mxu0 0
        %449 = vmatprep.subr.bf16.mxu0 0
        %450 = vmatpush2.bf16.msra.mxu0 0
        %451 = vmatprep.subr.bf16.mxu0 0
        %452 = vmatpush2.bf16.msra.mxu0 0
        %453 = vmatprep.mubr.bf16.mxu0 0
        %454 = vmatmul.mubr.bf16.gmra.mxu0 %v419
        %v455 = vpop.f32.mrf.mxu0
        %v456 = vadd.f32 0.0, %v455
        %v457 = vpop.f32.mrf.mxu0
        %v458 = vpop.f32.mrf.mxu0
        %v459 = vpop.f32.mrf.mxu0
        %460 = vdwg.mxu0
        %v465 = vunpack.c.l.b16 %v333
        %v466 = vunpack.c.l.b16 %v334
        %v467 = vunpack.c.l.b16 %v335
        %v468 = vunpack.c.l.b16 %v336
        %v469 = vpack.c.b16 %v466, %v465
        %v470 = vpack.c.b16 %v468, %v467
        %473 = vmatprep.subr.bf16.mxu0 0
        %474 = vmatpush1.bf16.msra.mxu0 0
        %475 = vmatprep.subr.bf16.mxu0 0
        %476 = vmatpush1.bf16.msra.mxu0 0
        %477 = vmatprep.subr.bf16.mxu0 0
        %478 = vmatpush1.bf16.msra.mxu0 0
        %479 = vmatprep.subr.bf16.mxu0 0
        %480 = vmatpush1.bf16.msra.mxu0 0
        %481 = vmatprep.subr.bf16.mxu0 0
        %482 = vmatpush1.bf16.msra.mxu0 0
        %483 = vmatprep.subr.bf16.mxu0 0
        %484 = vmatpush1.bf16.msra.mxu0 0
        %485 = vmatprep.subr.bf16.mxu0 0
        %486 = vmatpush1.bf16.msra.mxu0 %v470
        %487 = vmatprep.subr.bf16.mxu0 0
        %488 = vmatpush1.bf16.msra.mxu0 %v469
        %489 = vmatprep.subr.bf16.mxu0 0
        %490 = vmatpush2.bf16.msra.mxu0 0
        %491 = vmatprep.subr.bf16.mxu0 0
        %492 = vmatpush2.bf16.msra.mxu0 0
        %493 = vmatprep.subr.bf16.mxu0 0
        %494 = vmatpush2.bf16.msra.mxu0 0
        %495 = vmatprep.subr.bf16.mxu0 0
        %496 = vmatpush2.bf16.msra.mxu0 0
        %497 = vmatprep.subr.bf16.mxu0 0
        %498 = vmatpush2.bf16.msra.mxu0 0
        %499 = vmatprep.subr.bf16.mxu0 0
        %500 = vmatpush2.bf16.msra.mxu0 0
        %501 = vmatprep.subr.bf16.mxu0 0
        %502 = vmatpush2.bf16.msra.mxu0 0
        %503 = vmatprep.subr.bf16.mxu0 0
        %504 = vmatpush2.bf16.msra.mxu0 0
        %505 = vmatprep.mubr.bf16.mxu0 0
        %506 = vmatmul.mubr.bf16.gmra.mxu0 %v419
        %v507 = vpop.f32.mrf.mxu0
        %v508 = vadd.f32 0.0, %v507
        %v509 = vpop.f32.mrf.mxu0
        %v510 = vpop.f32.mrf.mxu0
        %v511 = vpop.f32.mrf.mxu0
        %512 = vdwg.mxu0
        %v517 = vunpack.c.l.b16 %v337
        %v518 = vunpack.c.l.b16 %v338
        %v519 = vunpack.c.l.b16 %v339
        %v520 = vunpack.c.l.b16 %v340
        %v521 = vpack.c.b16 %v518, %v517
        %v522 = vpack.c.b16 %v520, %v519
        %525 = vmatprep.subr.bf16.mxu0 0
        %526 = vmatpush1.bf16.msra.mxu0 0
        %527 = vmatprep.subr.bf16.mxu0 0
        %528 = vmatpush1.bf16.msra.mxu0 0
        %529 = vmatprep.subr.bf16.mxu0 0
        %530 = vmatpush1.bf16.msra.mxu0 0
        %531 = vmatprep.subr.bf16.mxu0 0
        %532 = vmatpush1.bf16.msra.mxu0 0
        %533 = vmatprep.subr.bf16.mxu0 0
        %534 = vmatpush1.bf16.msra.mxu0 0
        %535 = vmatprep.subr.bf16.mxu0 0
        %536 = vmatpush1.bf16.msra.mxu0 0
        %537 = vmatprep.subr.bf16.mxu0 0
        %538 = vmatpush1.bf16.msra.mxu0 %v522
        %539 = vmatprep.subr.bf16.mxu0 0
        %540 = vmatpush1.bf16.msra.mxu0 %v521
        %541 = vmatprep.subr.bf16.mxu0 0
        %542 = vmatpush2.bf16.msra.mxu0 0
        %543 = vmatprep.subr.bf16.mxu0 0
        %544 = vmatpush2.bf16.msra.mxu0 0
        %545 = vmatprep.subr.bf16.mxu0 0
        %546 = vmatpush2.bf16.msra.mxu0 0
        %547 = vmatprep.subr.bf16.mxu0 0
        %548 = vmatpush2.bf16.msra.mxu0 0
        %549 = vmatprep.subr.bf16.mxu0 0
        %550 = vmatpush2.bf16.msra.mxu0 0
        %551 = vmatprep.subr.bf16.mxu0 0
        %552 = vmatpush2.bf16.msra.mxu0 0
        %553 = vmatprep.subr.bf16.mxu0 0
        %554 = vmatpush2.bf16.msra.mxu0 0
        %555 = vmatprep.subr.bf16.mxu0 0
        %556 = vmatpush2.bf16.msra.mxu0 0
        %557 = vmatprep.mubr.bf16.mxu0 0
        %558 = vmatmul.mubr.bf16.gmra.mxu0 %v419
        %v559 = vpop.f32.mrf.mxu0
        %v560 = vadd.f32 0.0, %v559
        %v561 = vpop.f32.mrf.mxu0
        %v562 = vpop.f32.mrf.mxu0
        %v563 = vpop.f32.mrf.mxu0
        %564 = vdwg.mxu0
        %v565 = vmul.f32 %v456, 0.17677669
        %v566 = vpack.c.bf16 %v565, %v565
        %v567 = vpack.c.bf16 %v508, %v508
        %v568 = vpack.c.bf16 %v560, %v560
        %v570 = vsel %vm417, %v566, 0
        %v573 = vsel %vm417, %v567, 0
        %575 = vmatprep.subr.bf16.mxu0 0
        %576 = vmatpush1.bf16.xpose.msra.mxu0 0
        %577 = vmatprep.subr.bf16.mxu0 0
        %578 = vmatpush1.bf16.xpose.msra.mxu0 0
        %579 = vmatprep.subr.bf16.mxu0 0
        %580 = vmatpush1.bf16.xpose.msra.mxu0 0
        %581 = vmatprep.subr.bf16.mxu0 0
        %582 = vmatpush1.bf16.xpose.msra.mxu0 0
        %583 = vmatprep.subr.bf16.mxu0 0
        %584 = vmatpush1.bf16.xpose.msra.mxu0 0
        %585 = vmatprep.subr.bf16.mxu0 0
        %586 = vmatpush1.bf16.xpose.msra.mxu0 0
        %587 = vmatprep.subr.bf16.mxu0 0
        %588 = vmatpush1.bf16.xpose.msra.mxu0 0
        %589 = vmatprep.subr.bf16.mxu0 0
        %590 = vmatpush1.bf16.xpose.msra.mxu0 %v573
        %591 = vmatprep.subr.bf16.mxu0 0
        %592 = vmatpush2.bf16.xpose.msra.mxu0 0
        %593 = vmatprep.subr.bf16.mxu0 0
        %594 = vmatpush2.bf16.xpose.msra.mxu0 0
        %595 = vmatprep.subr.bf16.mxu0 0
        %596 = vmatpush2.bf16.xpose.msra.mxu0 0
        %597 = vmatprep.subr.bf16.mxu0 0
        %598 = vmatpush2.bf16.xpose.msra.mxu0 0
        %599 = vmatprep.subr.bf16.mxu0 0
        %600 = vmatpush2.bf16.xpose.msra.mxu0 0
        %601 = vmatprep.subr.bf16.mxu0 0
        %602 = vmatpush2.bf16.xpose.msra.mxu0 0
        %603 = vmatprep.subr.bf16.mxu0 0
        %604 = vmatpush2.bf16.xpose.msra.mxu0 0
        %605 = vmatprep.subr.bf16.mxu0 0
        %606 = vmatpush2.bf16.xpose.msra.mxu0 0
        %607 = vmatprep.mubr.bf16.mxu0 0
        %608 = vmatmul.mubr.bf16.gmra.mxu0 %v570
        %v609 = vpop.f32.mrf.mxu0
        %v610 = vadd.f32 0.0, %v609
        %v611 = vpop.f32.mrf.mxu0
        %v612 = vpop.f32.mrf.mxu0
        %v613 = vpop.f32.mrf.mxu0
        %614 = vdwg.mxu0
        %vm615 = vcmask 64512
        %v616 = vsel %vm615, %v610, -inf
        %617 = vmax.xlane.f32.xlu0 %v616
        %v618 = vpop.xlane.xlu0 %617
        %v619 = vsub.f32 %v610, %v618
        %v620 = vmul.f32 %v619, 1.442695
        %v621 = vpow.pop %v620
        %v622 = vsel %vm615, %v621, 0.0
        %623 = vadd.xlane.f32.xlu0 %v622
        %v624 = vpop.xlane.xlu0 %623
        %v625 = vrcp.pop %v624
        %v626 = vmul.f32 %v621, %v625
        %v627 = vpack.c.bf16 %v626, %v626
        %v629 = vsel %vm615, %v627, 0
        %vm631 = vcmask 1043456
        %v633 = vsel %vm631, %v568, 0
        %635 = vmatprep.subr.bf16.mxu0 0
        %636 = vmatpush1.bf16.msra.mxu0 0
        %637 = vmatprep.subr.bf16.mxu0 0
        %638 = vmatpush1.bf16.msra.mxu0 0
        %639 = vmatprep.subr.bf16.mxu0 0
        %640 = vmatpush1.bf16.msra.mxu0 0
        %641 = vmatprep.subr.bf16.mxu0 0
        %642 = vmatpush1.bf16.msra.mxu0 0
        %643 = vmatprep.subr.bf16.mxu0 0
        %644 = vmatpush1.bf16.msra.mxu0 0
        %645 = vmatprep.subr.bf16.mxu0 0
        %646 = vmatpush1.bf16.msra.mxu0 0
        %647 = vmatprep.subr.bf16.mxu0 0
        %648 = vmatpush1.bf16.msra.mxu0 0
        %649 = vmatprep.subr.bf16.mxu0 0
        %650 = vmatpush1.bf16.msra.mxu0 %v633
        %651 = vmatprep.subr.bf16.mxu0 0
        %652 = vmatpush2.bf16.msra.mxu0 0
        %653 = vmatprep.subr.bf16.mxu0 0
        %654 = vmatpush2.bf16.msra.mxu0 0
        %655 = vmatprep.subr.bf16.mxu0 0
        %656 = vmatpush2.bf16.msra.mxu0 0
        %657 = vmatprep.subr.bf16.mxu0 0
        %658 = vmatpush2.bf16.msra.mxu0 0
        %659 = vmatprep.subr.bf16.mxu0 0
        %660 = vmatpush2.bf16.msra.mxu0 0
        %661 = vmatprep.subr.bf16.mxu0 0
        %662 = vmatpush2.bf16.msra.mxu0 0
        %663 = vmatprep.subr.bf16.mxu0 0
        %664 = vmatpush2.bf16.msra.mxu0 0
        %665 = vmatprep.subr.bf16.mxu0 0
        %666 = vmatpush2.bf16.msra.mxu0 0
        %667 = vmatprep.mubr.bf16.mxu0 0
        %668 = vmatmul.mubr.bf16.gmra.mxu0 %v629
        %v669 = vpop.f32.mrf.mxu0
        %v670 = vadd.f32 0.0, %v669
        %v671 = vpop.f32.mrf.mxu0
        %v672 = vpop.f32.mrf.mxu0
        %v673 = vpop.f32.mrf.mxu0
        %674 = vdwg.mxu0
        %v675 = vadd.f32 %v326, %v670
        %v676 = vsel %vm417, %v675, 0.0
        %677 = vadd.xlane.f32.xlu0 %v676
        %v678 = vpop.xlane.xlu0 %677
        %v679 = vrcp.pop 32.0
        %v680 = vmul.f32 %v678, %v679
        %v681 = vsub.f32 %v675, %v680
        %v682 = vmul.f32 %v681, %v681
        %v683 = vsel %vm417, %v682, 0.0
        %684 = vadd.xlane.f32.xlu0 %v683
        %v685 = vpop.xlane.xlu0 %684
        %v686 = vmul.f32 %v685, %v679
        %v687 = vadd.f32 %v686, 1e-05
        %v688 = vrsqrt.pop %v687
        %v689 = vmul.f32 %v681, %v688
        %v690 = vlaneseq
        %v691 = vshrl.u32 %v690, 7
        %v692 = vsub.s32 0, %v691
        %v693 = vrot.slane %v401, %v692
        %v694 = vmul.f32 %v689, %v693
        %v695 = vlaneseq
        %v696 = vshrl.u32 %v695, 7
        %v697 = vsub.s32 1, %v696
        %v698 = vrot.slane %v401, %v697
        %v699 = vadd.f32 %v694, %v698
        %v700 = vpack.c.bf16 %v699, %v699
        %v705 = vunpack.c.l.b16 %v341
        %v706 = vunpack.c.l.b16 %v342
        %v707 = vunpack.c.l.b16 %v343
        %v708 = vunpack.c.l.b16 %v344
        %v709 = vpack.c.b16 %v706, %v705
        %v710 = vpack.c.b16 %v708, %v707
        %v714 = vsel %vm417, %v700, 0
        %716 = vmatprep.subr.bf16.mxu0 0
        %717 = vmatpush1.bf16.msra.mxu0 0
        %718 = vmatprep.subr.bf16.mxu0 0
        %719 = vmatpush1.bf16.msra.mxu0 0
        %720 = vmatprep.subr.bf16.mxu0 0
        %721 = vmatpush1.bf16.msra.mxu0 0
        %722 = vmatprep.subr.bf16.mxu0 0
        %723 = vmatpush1.bf16.msra.mxu0 0
        %724 = vmatprep.subr.bf16.mxu0 0
        %725 = vmatpush1.bf16.msra.mxu0 0
        %726 = vmatprep.subr.bf16.mxu0 0
        %727 = vmatpush1.bf16.msra.mxu0 0
        %728 = vmatprep.subr.bf16.mxu0 0
        %729 = vmatpush1.bf16.msra.mxu0 %v710
        %730 = vmatprep.subr.bf16.mxu0 0
        %731 = vmatpush1.bf16.msra.mxu0 %v709
        %732 = vmatprep.subr.bf16.mxu0 0
        %733 = vmatpush2.bf16.msra.mxu0 0
        %734 = vmatprep.subr.bf16.mxu0 0
        %735 = vmatpush2.bf16.msra.mxu0 0
        %736 = vmatprep.subr.bf16.mxu0 0
        %737 = vmatpush2.bf16.msra.mxu0 0
        %738 = vmatprep.subr.bf16.mxu0 0
        %739 = vmatpush2.bf16.msra.mxu0 0
        %740 = vmatprep.subr.bf16.mxu0 0
        %741 = vmatpush2.bf16.msra.mxu0 0
        %742 = vmatprep.subr.bf16.mxu0 0
        %743 = vmatpush2.bf16.msra.mxu0 0
        %744 = vmatprep.subr.bf16.mxu0 0
        %745 = vmatpush2.bf16.msra.mxu0 0
        %746 = vmatprep.subr.bf16.mxu0 0
        %747 = vmatpush2.bf16.msra.mxu0 0
        %748 = vmatprep.mubr.bf16.mxu0 0
        %749 = vmatmul.mubr.bf16.gmra.mxu0 %v714
        %v750 = vpop.f32.mrf.mxu0
        %v751 = vadd.f32 0.0, %v750
        %v752 = vpop.f32.mrf.mxu0
        %v753 = vpop.f32.mrf.mxu0
        %v754 = vpop.f32.mrf.mxu0
        %755 = vdwg.mxu0
        %v756 = vmax.f32 %v751, 0.0
        %v757 = vpack.c.bf16 %v756, %v756
        %v762 = vunpack.c.l.b16 %v345
        %v763 = vunpack.c.l.b16 %v346
        %v764 = vunpack.c.l.b16 %v347
        %v765 = vunpack.c.l.b16 %v348
        %v766 = vpack.c.b16 %v763, %v762
        %v767 = vpack.c.b16 %v765, %v764
        %v771 = vsel %vm417, %v757, 0
        %773 = vmatprep.subr.bf16.mxu0 0
        %774 = vmatpush1.bf16.msra.mxu0 0
        %775 = vmatprep.subr.bf16.mxu0 0
        %776 = vmatpush1.bf16.msra.mxu0 0
        %777 = vmatprep.subr.bf16.mxu0 0
        %778 = vmatpush1.bf16.msra.mxu0 0
        %779 = vmatprep.subr.bf16.mxu0 0
        %780 = vmatpush1.bf16.msra.mxu0 0
        %781 = vmatprep.subr.bf16.mxu0 0
        %782 = vmatpush1.bf16.msra.mxu0 0
        %783 = vmatprep.subr.bf16.mxu0 0
        %784 = vmatpush1.bf16.msra.mxu0 0
        %785 = vmatprep.subr.bf16.mxu0 0
        %786 = vmatpush1.bf16.msra.mxu0 %v767
        %787 = vmatprep.subr.bf16.mxu0 0
        %788 = vmatpush1.bf16.msra.mxu0 %v766
        %789 = vmatprep.subr.bf16.mxu0 0
        %790 = vmatpush2.bf16.msra.mxu0 0
        %791 = vmatprep.subr.bf16.mxu0 0
        %792 = vmatpush2.bf16.msra.mxu0 0
        %793 = vmatprep.subr.bf16.mxu0 0
        %794 = vmatpush2.bf16.msra.mxu0 0
        %795 = vmatprep.subr.bf16.mxu0 0
        %796 = vmatpush2.bf16.msra.mxu0 0
        %797 = vmatprep.subr.bf16.mxu0 0
        %798 = vmatpush2.bf16.msra.mxu0 0
        %799 = vmatprep.subr.bf16.mxu0 0
        %800 = vmatpush2.bf16.msra.mxu0 0
        %801 = vmatprep.subr.bf16.mxu0 0
        %802 = vmatpush2.bf16.msra.mxu0 0
        %803 = vmatprep.subr.bf16.mxu0 0
        %804 = vmatpush2.bf16.msra.mxu0 0
        %805 = vmatprep.mubr.bf16.mxu0 0
        %806 = vmatmul.mubr.bf16.gmra.mxu0 %v771
        %v807 = vpop.f32.mrf.mxu0
        %v808 = vadd.f32 0.0, %v807
        %v809 = vpop.f32.mrf.mxu0
        %v810 = vpop.f32.mrf.mxu0
        %v811 = vpop.f32.mrf.mxu0
        %812 = vdwg.mxu0
        %v813 = vadd.f32 %v699, %v808
        %v814 = vsel %vm417, %v813, 0.0
        %815 = vadd.xlane.f32.xlu0 %v814
        %v816 = vpop.xlane.xlu0 %815
        %v817 = vmul.f32 %v816, %v679
        %v818 = vsub.f32 %v813, %v817
        %v819 = vmul.f32 %v818, %v818
        %v820 = vsel %vm417, %v819, 0.0
        %821 = vadd.xlane.f32.xlu0 %v820
        %v822 = vpop.xlane.xlu0 %821
        %v823 = vmul.f32 %v822, %v679
        %v824 = vadd.f32 %v823, 1e-05
        %v825 = vrsqrt.pop %v824
        %v826 = vmul.f32 %v818, %v825
        %v827 = vlaneseq
        %v828 = vshrl.u32 %v827, 7
        %v829 = vsub.s32 2, %v828
        %v830 = vrot.slane %v401, %v829
        %v831 = vmul.f32 %v826, %v830
        %v832 = vlaneseq
        %v833 = vshrl.u32 %v832, 7
        %v834 = vsub.s32 3, %v833
        %v835 = vrot.slane %v401, %v834
        %v836 = vadd.f32 %v831, %v835
        %v837 = vpack.c.bf16 %v836, %v836
        %v842 = vunpack.c.l.b16 %v349
        %v843 = vunpack.c.l.b16 %v350
        %v844 = vunpack.c.l.b16 %v351
        %v845 = vunpack.c.l.b16 %v352
        %v846 = vpack.c.b16 %v843, %v842
        %v847 = vpack.c.b16 %v845, %v844
        %v851 = vsel %vm417, %v837, 0
        %853 = vmatprep.subr.bf16.mxu0 0
        %854 = vmatpush1.bf16.msra.mxu0 0
        %855 = vmatprep.subr.bf16.mxu0 0
        %856 = vmatpush1.bf16.msra.mxu0 0
        %857 = vmatprep.subr.bf16.mxu0 0
        %858 = vmatpush1.bf16.msra.mxu0 0
        %859 = vmatprep.subr.bf16.mxu0 0
        %860 = vmatpush1.bf16.msra.mxu0 0
        %861 = vmatprep.subr.bf16.mxu0 0
        %862 = vmatpush1.bf16.msra.mxu0 0
        %863 = vmatprep.subr.bf16.mxu0 0
        %864 = vmatpush1.bf16.msra.mxu0 0
        %865 = vmatprep.subr.bf16.mxu0 0
        %866 = vmatpush1.bf16.msra.mxu0 %v847
        %867 = vmatprep.subr.bf16.mxu0 0
        %868 = vmatpush1.bf16.msra.mxu0 %v846
        %869 = vmatprep.subr.bf16.mxu0 0
        %870 = vmatpush2.bf16.msra.mxu0 0
        %871 = vmatprep.subr.bf16.mxu0 0
        %872 = vmatpush2.bf16.msra.mxu0 0
        %873 = vmatprep.subr.bf16.mxu0 0
        %874 = vmatpush2.bf16.msra.mxu0 0
        %875 = vmatprep.subr.bf16.mxu0 0
        %876 = vmatpush2.bf16.msra.mxu0 0
        %877 = vmatprep.subr.bf16.mxu0 0
        %878 = vmatpush2.bf16.msra.mxu0 0
        %879 = vmatprep.subr.bf16.mxu0 0
        %880 = vmatpush2.bf16.msra.mxu0 0
        %881 = vmatprep.subr.bf16.mxu0 0
        %882 = vmatpush2.bf16.msra.mxu0 0
        %883 = vmatprep.subr.bf16.mxu0 0
        %884 = vmatpush2.bf16.msra.mxu0 0
        %885 = vmatprep.mubr.bf16.mxu0 0
        %886 = vmatmul.mubr.bf16.gmra.mxu0 %v851
        %v887 = vpop.f32.mrf.mxu0
        %v888 = vadd.f32 0.0, %v887
        %v889 = vpop.f32.mrf.mxu0
        %v890 = vpop.f32.mrf.mxu0
        %v891 = vpop.f32.mrf.mxu0
        %892 = vdwg.mxu0
        %v893 = vmul.f32 %v836, 0.4
        %v894 = vadd.f32 %v893, 0.0
        %v895 = vmul.f32 %v888, 0.4
        %v896 = vadd.f32 %v895, 0.0
        %v897 = vpack.c.bf16 %v327, %v327
        %v902 = vunpack.c.l.b16 %v353
        %v903 = vunpack.c.l.b16 %v354
        %v904 = vunpack.c.l.b16 %v355
        %v905 = vunpack.c.l.b16 %v356
        %v906 = vpack.c.b16 %v903, %v902
        %v907 = vpack.c.b16 %v905, %v904
        %v911 = vsel %vm417, %v897, 0
        %913 = vmatprep.subr.bf16.mxu0 0
        %914 = vmatpush1.bf16.msra.mxu0 0
        %915 = vmatprep.subr.bf16.mxu0 0
        %916 = vmatpush1.bf16.msra.mxu0 0
        %917 = vmatprep.subr.bf16.mxu0 0
        %918 = vmatpush1.bf16.msra.mxu0 0
        %919 = vmatprep.subr.bf16.mxu0 0
        %920 = vmatpush1.bf16.msra.mxu0 0
        %921 = vmatprep.subr.bf16.mxu0 0
        %922 = vmatpush1.bf16.msra.mxu0 0
        %923 = vmatprep.subr.bf16.mxu0 0
        %924 = vmatpush1.bf16.msra.mxu0 0
        %925 = vmatprep.subr.bf16.mxu0 0
        %926 = vmatpush1.bf16.msra.mxu0 %v907
        %927 = vmatprep.subr.bf16.mxu0 0
        %928 = vmatpush1.bf16.msra.mxu0 %v906
        %929 = vmatprep.subr.bf16.mxu0 0
        %930 = vmatpush2.bf16.msra.mxu0 0
        %931 = vmatprep.subr.bf16.mxu0 0
        %932 = vmatpush2.bf16.msra.mxu0 0
        %933 = vmatprep.subr.bf16.mxu0 0
        %934 = vmatpush2.bf16.msra.mxu0 0
        %935 = vmatprep.subr.bf16.mxu0 0
        %936 = vmatpush2.bf16.msra.mxu0 0
        %937 = vmatprep.subr.bf16.mxu0 0
        %938 = vmatpush2.bf16.msra.mxu0 0
        %939 = vmatprep.subr.bf16.mxu0 0
        %940 = vmatpush2.bf16.msra.mxu0 0
        %941 = vmatprep.subr.bf16.mxu0 0
        %942 = vmatpush2.bf16.msra.mxu0 0
        %943 = vmatprep.subr.bf16.mxu0 0
        %944 = vmatpush2.bf16.msra.mxu0 0
        %945 = vmatprep.mubr.bf16.mxu0 0
        %946 = vmatmul.mubr.bf16.gmra.mxu0 %v911
        %v947 = vpop.f32.mrf.mxu0
        %v948 = vadd.f32 0.0, %v947
        %v949 = vpop.f32.mrf.mxu0
        %v950 = vpop.f32.mrf.mxu0
        %v951 = vpop.f32.mrf.mxu0
        %952 = vdwg.mxu0
        %v957 = vunpack.c.l.b16 %v357
        %v958 = vunpack.c.l.b16 %v358
        %v959 = vunpack.c.l.b16 %v359
        %v960 = vunpack.c.l.b16 %v360
        %v961 = vpack.c.b16 %v958, %v957
        %v962 = vpack.c.b16 %v960, %v959
        %965 = vmatprep.subr.bf16.mxu0 0
        %966 = vmatpush1.bf16.msra.mxu0 0
        %967 = vmatprep.subr.bf16.mxu0 0
        %968 = vmatpush1.bf16.msra.mxu0 0
        %969 = vmatprep.subr.bf16.mxu0 0
        %970 = vmatpush1.bf16.msra.mxu0 0
        %971 = vmatprep.subr.bf16.mxu0 0
        %972 = vmatpush1.bf16.msra.mxu0 0
        %973 = vmatprep.subr.bf16.mxu0 0
        %974 = vmatpush1.bf16.msra.mxu0 0
        %975 = vmatprep.subr.bf16.mxu0 0
        %976 = vmatpush1.bf16.msra.mxu0 0
        %977 = vmatprep.subr.bf16.mxu0 0
        %978 = vmatpush1.bf16.msra.mxu0 %v962
        %979 = vmatprep.subr.bf16.mxu0 0
        %980 = vmatpush1.bf16.msra.mxu0 %v961
        %981 = vmatprep.subr.bf16.mxu0 0
        %982 = vmatpush2.bf16.msra.mxu0 0
        %983 = vmatprep.subr.bf16.mxu0 0
        %984 = vmatpush2.bf16.msra.mxu0 0
        %985 = vmatprep.subr.bf16.mxu0 0
        %986 = vmatpush2.bf16.msra.mxu0 0
        %987 = vmatprep.subr.bf16.mxu0 0
        %988 = vmatpush2.bf16.msra.mxu0 0
        %989 = vmatprep.subr.bf16.mxu0 0
        %990 = vmatpush2.bf16.msra.mxu0 0
        %991 = vmatprep.subr.bf16.mxu0 0
        %992 = vmatpush2.bf16.msra.mxu0 0
        %993 = vmatprep.subr.bf16.mxu0 0
        %994 = vmatpush2.bf16.msra.mxu0 0
        %995 = vmatprep.subr.bf16.mxu0 0
        %996 = vmatpush2.bf16.msra.mxu0 0
        %997 = vmatprep.mubr.bf16.mxu0 0
        %998 = vmatmul.mubr.bf16.gmra.mxu0 %v911
        %v999 = vpop.f32.mrf.mxu0
        %v1000 = vadd.f32 0.0, %v999
        %v1001 = vpop.f32.mrf.mxu0
        %v1002 = vpop.f32.mrf.mxu0
        %v1003 = vpop.f32.mrf.mxu0
        %1004 = vdwg.mxu0
        %v1009 = vunpack.c.l.b16 %v361
        %v1010 = vunpack.c.l.b16 %v362
        %v1011 = vunpack.c.l.b16 %v363
        %v1012 = vunpack.c.l.b16 %v364
        %v1013 = vpack.c.b16 %v1010, %v1009
        %v1014 = vpack.c.b16 %v1012, %v1011
        %1017 = vmatprep.subr.bf16.mxu0 0
        %1018 = vmatpush1.bf16.msra.mxu0 0
        %1019 = vmatprep.subr.bf16.mxu0 0
        %1020 = vmatpush1.bf16.msra.mxu0 0
        %1021 = vmatprep.subr.bf16.mxu0 0
        %1022 = vmatpush1.bf16.msra.mxu0 0
        %1023 = vmatprep.subr.bf16.mxu0 0
        %1024 = vmatpush1.bf16.msra.mxu0 0
        %1025 = vmatprep.subr.bf16.mxu0 0
        %1026 = vmatpush1.bf16.msra.mxu0 0
        %1027 = vmatprep.subr.bf16.mxu0 0
        %1028 = vmatpush1.bf16.msra.mxu0 0
        %1029 = vmatprep.subr.bf16.mxu0 0
        %1030 = vmatpush1.bf16.msra.mxu0 %v1014
        %1031 = vmatprep.subr.bf16.mxu0 0
        %1032 = vmatpush1.bf16.msra.mxu0 %v1013
        %1033 = vmatprep.subr.bf16.mxu0 0
        %1034 = vmatpush2.bf16.msra.mxu0 0
        %1035 = vmatprep.subr.bf16.mxu0 0
        %1036 = vmatpush2.bf16.msra.mxu0 0
        %1037 = vmatprep.subr.bf16.mxu0 0
        %1038 = vmatpush2.bf16.msra.mxu0 0
        %1039 = vmatprep.subr.bf16.mxu0 0
        %1040 = vmatpush2.bf16.msra.mxu0 0
        %1041 = vmatprep.subr.bf16.mxu0 0
        %1042 = vmatpush2.bf16.msra.mxu0 0
        %1043 = vmatprep.subr.bf16.mxu0 0
        %1044 = vmatpush2.bf16.msra.mxu0 0
        %1045 = vmatprep.subr.bf16.mxu0 0
        %1046 = vmatpush2.bf16.msra.mxu0 0
        %1047 = vmatprep.subr.bf16.mxu0 0
        %1048 = vmatpush2.bf16.msra.mxu0 0
        %1049 = vmatprep.mubr.bf16.mxu0 0
        %1050 = vmatmul.mubr.bf16.gmra.mxu0 %v911
        %v1051 = vpop.f32.mrf.mxu0
        %v1052 = vadd.f32 0.0, %v1051
        %v1053 = vpop.f32.mrf.mxu0
        %v1054 = vpop.f32.mrf.mxu0
        %v1055 = vpop.f32.mrf.mxu0
        %1056 = vdwg.mxu0
        %v1057 = vmul.f32 %v948, 0.17677669
        %v1058 = vpack.c.bf16 %v1057, %v1057
        %v1059 = vpack.c.bf16 %v1000, %v1000
        %v1060 = vpack.c.bf16 %v1052, %v1052
        %v1062 = vsel %vm417, %v1058, 0
        %v1065 = vsel %vm417, %v1059, 0
        %1067 = vmatprep.subr.bf16.mxu0 0
        %1068 = vmatpush1.bf16.xpose.msra.mxu0 0
        %1069 = vmatprep.subr.bf16.mxu0 0
        %1070 = vmatpush1.bf16.xpose.msra.mxu0 0
        %1071 = vmatprep.subr.bf16.mxu0 0
        %1072 = vmatpush1.bf16.xpose.msra.mxu0 0
        %1073 = vmatprep.subr.bf16.mxu0 0
        %1074 = vmatpush1.bf16.xpose.msra.mxu0 0
        %1075 = vmatprep.subr.bf16.mxu0 0
        %1076 = vmatpush1.bf16.xpose.msra.mxu0 0
        %1077 = vmatprep.subr.bf16.mxu0 0
        %1078 = vmatpush1.bf16.xpose.msra.mxu0 0
        %1079 = vmatprep.subr.bf16.mxu0 0
        %1080 = vmatpush1.bf16.xpose.msra.mxu0 0
        %1081 = vmatprep.subr.bf16.mxu0 0
        %1082 = vmatpush1.bf16.xpose.msra.mxu0 %v1065
        %1083 = vmatprep.subr.bf16.mxu0 0
        %1084 = vmatpush2.bf16.xpose.msra.mxu0 0
        %1085 = vmatprep.subr.bf16.mxu0 0
        %1086 = vmatpush2.bf16.xpose.msra.mxu0 0
        %1087 = vmatprep.subr.bf16.mxu0 0
        %1088 = vmatpush2.bf16.xpose.msra.mxu0 0
        %1089 = vmatprep.subr.bf16.mxu0 0
        %1090 = vmatpush2.bf16.xpose.msra.mxu0 0
        %1091 = vmatprep.subr.bf16.mxu0 0
        %1092 = vmatpush2.bf16.xpose.msra.mxu0 0
        %1093 = vmatprep.subr.bf16.mxu0 0
        %1094 = vmatpush2.bf16.xpose.msra.mxu0 0
        %1095 = vmatprep.subr.bf16.mxu0 0
        %1096 = vmatpush2.bf16.xpose.msra.mxu0 0
        %1097 = vmatprep.subr.bf16.mxu0 0
        %1098 = vmatpush2.bf16.xpose.msra.mxu0 0
        %1099 = vmatprep.mubr.bf16.mxu0 0
        %1100 = vmatmul.mubr.bf16.gmra.mxu0 %v1062
        %v1101 = vpop.f32.mrf.mxu0
        %v1102 = vadd.f32 0.0, %v1101
        %v1103 = vpop.f32.mrf.mxu0
        %v1104 = vpop.f32.mrf.mxu0
        %v1105 = vpop.f32.mrf.mxu0
        %1106 = vdwg.mxu0
        %v1107 = vsel %vm615, %v1102, -inf
        %1108 = vmax.xlane.f32.xlu0 %v1107
        %v1109 = vpop.xlane.xlu0 %1108
        %v1110 = vsub.f32 %v1102, %v1109
        %v1111 = vmul.f32 %v1110, 1.442695
        %v1112 = vpow.pop %v1111
        %v1113 = vsel %vm615, %v1112, 0.0
        %1114 = vadd.xlane.f32.xlu0 %v1113
        %v1115 = vpop.xlane.xlu0 %1114
        %v1116 = vrcp.pop %v1115
        %v1117 = vmul.f32 %v1112, %v1116
        %v1118 = vpack.c.bf16 %v1117, %v1117
        %v1120 = vsel %vm615, %v1118, 0
        %v1123 = vsel %vm631, %v1060, 0
        %1125 = vmatprep.subr.bf16.mxu0 0
        %1126 = vmatpush1.bf16.msra.mxu0 0
        %1127 = vmatprep.subr.bf16.mxu0 0
        %1128 = vmatpush1.bf16.msra.mxu0 0
        %1129 = vmatprep.subr.bf16.mxu0 0
        %1130 = vmatpush1.bf16.msra.mxu0 0
        %1131 = vmatprep.subr.bf16.mxu0 0
        %1132 = vmatpush1.bf16.msra.mxu0 0
        %1133 = vmatprep.subr.bf16.mxu0 0
        %1134 = vmatpush1.bf16.msra.mxu0 0
        %1135 = vmatprep.subr.bf16.mxu0 0
        %1136 = vmatpush1.bf16.msra.mxu0 0
        %1137 = vmatprep.subr.bf16.mxu0 0
        %1138 = vmatpush1.bf16.msra.mxu0 0
        %1139 = vmatprep.subr.bf16.mxu0 0
        %1140 = vmatpush1.bf16.msra.mxu0 %v1123
        %1141 = vmatprep.subr.bf16.mxu0 0
        %1142 = vmatpush2.bf16.msra.mxu0 0
        %1143 = vmatprep.subr.bf16.mxu0 0
        %1144 = vmatpush2.bf16.msra.mxu0 0
        %1145 = vmatprep.subr.bf16.mxu0 0
        %1146 = vmatpush2.bf16.msra.mxu0 0
        %1147 = vmatprep.subr.bf16.mxu0 0
        %1148 = vmatpush2.bf16.msra.mxu0 0
        %1149 = vmatprep.subr.bf16.mxu0 0
        %1150 = vmatpush2.bf16.msra.mxu0 0
        %1151 = vmatprep.subr.bf16.mxu0 0
        %1152 = vmatpush2.bf16.msra.mxu0 0
        %1153 = vmatprep.subr.bf16.mxu0 0
        %1154 = vmatpush2.bf16.msra.mxu0 0
        %1155 = vmatprep.subr.bf16.mxu0 0
        %1156 = vmatpush2.bf16.msra.mxu0 0
        %1157 = vmatprep.mubr.bf16.mxu0 0
        %1158 = vmatmul.mubr.bf16.gmra.mxu0 %v1120
        %v1159 = vpop.f32.mrf.mxu0
        %v1160 = vadd.f32 0.0, %v1159
        %v1161 = vpop.f32.mrf.mxu0
        %v1162 = vpop.f32.mrf.mxu0
        %v1163 = vpop.f32.mrf.mxu0
        %1164 = vdwg.mxu0
        %v1165 = vadd.f32 %v327, %v1160
        %v1166 = vsel %vm417, %v1165, 0.0
        %1167 = vadd.xlane.f32.xlu0 %v1166
        %v1168 = vpop.xlane.xlu0 %1167
        %v1169 = vmul.f32 %v1168, %v679
        %v1170 = vsub.f32 %v1165, %v1169
        %v1171 = vmul.f32 %v1170, %v1170
        %v1172 = vsel %vm417, %v1171, 0.0
        %1173 = vadd.xlane.f32.xlu0 %v1172
        %v1174 = vpop.xlane.xlu0 %1173
        %v1175 = vmul.f32 %v1174, %v679
        %v1176 = vadd.f32 %v1175, 1e-05
        %v1177 = vrsqrt.pop %v1176
        %v1178 = vmul.f32 %v1170, %v1177
        %v1179 = vlaneseq
        %v1180 = vshrl.u32 %v1179, 7
        %v1181 = vsub.s32 0, %v1180
        %v1182 = vrot.slane %v402, %v1181
        %v1183 = vmul.f32 %v1178, %v1182
        %v1184 = vlaneseq
        %v1185 = vshrl.u32 %v1184, 7
        %v1186 = vsub.s32 1, %v1185
        %v1187 = vrot.slane %v402, %v1186
        %v1188 = vadd.f32 %v1183, %v1187
        %v1189 = vpack.c.bf16 %v1188, %v1188
        %v1194 = vunpack.c.l.b16 %v365
        %v1195 = vunpack.c.l.b16 %v366
        %v1196 = vunpack.c.l.b16 %v367
        %v1197 = vunpack.c.l.b16 %v368
        %v1198 = vpack.c.b16 %v1195, %v1194
        %v1199 = vpack.c.b16 %v1197, %v1196
        %v1203 = vsel %vm417, %v1189, 0
        %1205 = vmatprep.subr.bf16.mxu0 0
        %1206 = vmatpush1.bf16.msra.mxu0 0
        %1207 = vmatprep.subr.bf16.mxu0 0
        %1208 = vmatpush1.bf16.msra.mxu0 0
        %1209 = vmatprep.subr.bf16.mxu0 0
        %1210 = vmatpush1.bf16.msra.mxu0 0
        %1211 = vmatprep.subr.bf16.mxu0 0
        %1212 = vmatpush1.bf16.msra.mxu0 0
        %1213 = vmatprep.subr.bf16.mxu0 0
        %1214 = vmatpush1.bf16.msra.mxu0 0
        %1215 = vmatprep.subr.bf16.mxu0 0
        %1216 = vmatpush1.bf16.msra.mxu0 0
        %1217 = vmatprep.subr.bf16.mxu0 0
        %1218 = vmatpush1.bf16.msra.mxu0 %v1199
        %1219 = vmatprep.subr.bf16.mxu0 0
        %1220 = vmatpush1.bf16.msra.mxu0 %v1198
        %1221 = vmatprep.subr.bf16.mxu0 0
        %1222 = vmatpush2.bf16.msra.mxu0 0
        %1223 = vmatprep.subr.bf16.mxu0 0
        %1224 = vmatpush2.bf16.msra.mxu0 0
        %1225 = vmatprep.subr.bf16.mxu0 0
        %1226 = vmatpush2.bf16.msra.mxu0 0
        %1227 = vmatprep.subr.bf16.mxu0 0
        %1228 = vmatpush2.bf16.msra.mxu0 0
        %1229 = vmatprep.subr.bf16.mxu0 0
        %1230 = vmatpush2.bf16.msra.mxu0 0
        %1231 = vmatprep.subr.bf16.mxu0 0
        %1232 = vmatpush2.bf16.msra.mxu0 0
        %1233 = vmatprep.subr.bf16.mxu0 0
        %1234 = vmatpush2.bf16.msra.mxu0 0
        %1235 = vmatprep.subr.bf16.mxu0 0
        %1236 = vmatpush2.bf16.msra.mxu0 0
        %1237 = vmatprep.mubr.bf16.mxu0 0
        %1238 = vmatmul.mubr.bf16.gmra.mxu0 %v1203
        %v1239 = vpop.f32.mrf.mxu0
        %v1240 = vadd.f32 0.0, %v1239
        %v1241 = vpop.f32.mrf.mxu0
        %v1242 = vpop.f32.mrf.mxu0
        %v1243 = vpop.f32.mrf.mxu0
        %1244 = vdwg.mxu0
        %v1245 = vmax.f32 %v1240, 0.0
        %v1246 = vpack.c.bf16 %v1245, %v1245
        %v1251 = vunpack.c.l.b16 %v369
        %v1252 = vunpack.c.l.b16 %v370
        %v1253 = vunpack.c.l.b16 %v371
        %v1254 = vunpack.c.l.b16 %v372
        %v1255 = vpack.c.b16 %v1252, %v1251
        %v1256 = vpack.c.b16 %v1254, %v1253
        %v1260 = vsel %vm417, %v1246, 0
        %1262 = vmatprep.subr.bf16.mxu0 0
        %1263 = vmatpush1.bf16.msra.mxu0 0
        %1264 = vmatprep.subr.bf16.mxu0 0
        %1265 = vmatpush1.bf16.msra.mxu0 0
        %1266 = vmatprep.subr.bf16.mxu0 0
        %1267 = vmatpush1.bf16.msra.mxu0 0
        %1268 = vmatprep.subr.bf16.mxu0 0
        %1269 = vmatpush1.bf16.msra.mxu0 0
        %1270 = vmatprep.subr.bf16.mxu0 0
        %1271 = vmatpush1.bf16.msra.mxu0 0
        %1272 = vmatprep.subr.bf16.mxu0 0
        %1273 = vmatpush1.bf16.msra.mxu0 0
        %1274 = vmatprep.subr.bf16.mxu0 0
        %1275 = vmatpush1.bf16.msra.mxu0 %v1256
        %1276 = vmatprep.subr.bf16.mxu0 0
        %1277 = vmatpush1.bf16.msra.mxu0 %v1255
        %1278 = vmatprep.subr.bf16.mxu0 0
        %1279 = vmatpush2.bf16.msra.mxu0 0
        %1280 = vmatprep.subr.bf16.mxu0 0
        %1281 = vmatpush2.bf16.msra.mxu0 0
        %1282 = vmatprep.subr.bf16.mxu0 0
        %1283 = vmatpush2.bf16.msra.mxu0 0
        %1284 = vmatprep.subr.bf16.mxu0 0
        %1285 = vmatpush2.bf16.msra.mxu0 0
        %1286 = vmatprep.subr.bf16.mxu0 0
        %1287 = vmatpush2.bf16.msra.mxu0 0
        %1288 = vmatprep.subr.bf16.mxu0 0
        %1289 = vmatpush2.bf16.msra.mxu0 0
        %1290 = vmatprep.subr.bf16.mxu0 0
        %1291 = vmatpush2.bf16.msra.mxu0 0
        %1292 = vmatprep.subr.bf16.mxu0 0
        %1293 = vmatpush2.bf16.msra.mxu0 0
        %1294 = vmatprep.mubr.bf16.mxu0 0
        %1295 = vmatmul.mubr.bf16.gmra.mxu0 %v1260
        %v1296 = vpop.f32.mrf.mxu0
        %v1297 = vadd.f32 0.0, %v1296
        %v1298 = vpop.f32.mrf.mxu0
        %v1299 = vpop.f32.mrf.mxu0
        %v1300 = vpop.f32.mrf.mxu0
        %1301 = vdwg.mxu0
        %v1302 = vadd.f32 %v1188, %v1297
        %v1303 = vsel %vm417, %v1302, 0.0
        %1304 = vadd.xlane.f32.xlu0 %v1303
        %v1305 = vpop.xlane.xlu0 %1304
        %v1306 = vmul.f32 %v1305, %v679
        %v1307 = vsub.f32 %v1302, %v1306
        %v1308 = vmul.f32 %v1307, %v1307
        %v1309 = vsel %vm417, %v1308, 0.0
        %1310 = vadd.xlane.f32.xlu0 %v1309
        %v1311 = vpop.xlane.xlu0 %1310
        %v1312 = vmul.f32 %v1311, %v679
        %v1313 = vadd.f32 %v1312, 1e-05
        %v1314 = vrsqrt.pop %v1313
        %v1315 = vmul.f32 %v1307, %v1314
        %v1316 = vlaneseq
        %v1317 = vshrl.u32 %v1316, 7
        %v1318 = vsub.s32 2, %v1317
        %v1319 = vrot.slane %v402, %v1318
        %v1320 = vmul.f32 %v1315, %v1319
        %v1321 = vlaneseq
        %v1322 = vshrl.u32 %v1321, 7
        %v1323 = vsub.s32 3, %v1322
        %v1324 = vrot.slane %v402, %v1323
        %v1325 = vadd.f32 %v1320, %v1324
        %v1326 = vpack.c.bf16 %v1325, %v1325
        %v1331 = vunpack.c.l.b16 %v373
        %v1332 = vunpack.c.l.b16 %v374
        %v1333 = vunpack.c.l.b16 %v375
        %v1334 = vunpack.c.l.b16 %v376
        %v1335 = vpack.c.b16 %v1332, %v1331
        %v1336 = vpack.c.b16 %v1334, %v1333
        %v1340 = vsel %vm417, %v1326, 0
        %1342 = vmatprep.subr.bf16.mxu0 0
        %1343 = vmatpush1.bf16.msra.mxu0 0
        %1344 = vmatprep.subr.bf16.mxu0 0
        %1345 = vmatpush1.bf16.msra.mxu0 0
        %1346 = vmatprep.subr.bf16.mxu0 0
        %1347 = vmatpush1.bf16.msra.mxu0 0
        %1348 = vmatprep.subr.bf16.mxu0 0
        %1349 = vmatpush1.bf16.msra.mxu0 0
        %1350 = vmatprep.subr.bf16.mxu0 0
        %1351 = vmatpush1.bf16.msra.mxu0 0
        %1352 = vmatprep.subr.bf16.mxu0 0
        %1353 = vmatpush1.bf16.msra.mxu0 0
        %1354 = vmatprep.subr.bf16.mxu0 0
        %1355 = vmatpush1.bf16.msra.mxu0 %v1336
        %1356 = vmatprep.subr.bf16.mxu0 0
        %1357 = vmatpush1.bf16.msra.mxu0 %v1335
        %1358 = vmatprep.subr.bf16.mxu0 0
        %1359 = vmatpush2.bf16.msra.mxu0 0
        %1360 = vmatprep.subr.bf16.mxu0 0
        %1361 = vmatpush2.bf16.msra.mxu0 0
        %1362 = vmatprep.subr.bf16.mxu0 0
        %1363 = vmatpush2.bf16.msra.mxu0 0
        %1364 = vmatprep.subr.bf16.mxu0 0
        %1365 = vmatpush2.bf16.msra.mxu0 0
        %1366 = vmatprep.subr.bf16.mxu0 0
        %1367 = vmatpush2.bf16.msra.mxu0 0
        %1368 = vmatprep.subr.bf16.mxu0 0
        %1369 = vmatpush2.bf16.msra.mxu0 0
        %1370 = vmatprep.subr.bf16.mxu0 0
        %1371 = vmatpush2.bf16.msra.mxu0 0
        %1372 = vmatprep.subr.bf16.mxu0 0
        %1373 = vmatpush2.bf16.msra.mxu0 0
        %1374 = vmatprep.mubr.bf16.mxu0 0
        %1375 = vmatmul.mubr.bf16.gmra.mxu0 %v1340
        %v1376 = vpop.f32.mrf.mxu0
        %v1377 = vadd.f32 0.0, %v1376
        %v1378 = vpop.f32.mrf.mxu0
        %v1379 = vpop.f32.mrf.mxu0
        %v1380 = vpop.f32.mrf.mxu0
        %1381 = vdwg.mxu0
        %v1382 = vmul.f32 %v1325, 0.3
        %v1383 = vadd.f32 %v894, %v1382
        %v1384 = vmul.f32 %v1377, 0.3
        %v1385 = vadd.f32 %v896, %v1384
        %v1386 = vpack.c.bf16 %v328, %v328
        %v1391 = vunpack.c.l.b16 %v377
        %v1392 = vunpack.c.l.b16 %v378
        %v1393 = vunpack.c.l.b16 %v379
        %v1394 = vunpack.c.l.b16 %v380
        %v1395 = vpack.c.b16 %v1392, %v1391
        %v1396 = vpack.c.b16 %v1394, %v1393
        %v1400 = vsel %vm417, %v1386, 0
        %1402 = vmatprep.subr.bf16.mxu0 0
        %1403 = vmatpush1.bf16.msra.mxu0 0
        %1404 = vmatprep.subr.bf16.mxu0 0
        %1405 = vmatpush1.bf16.msra.mxu0 0
        %1406 = vmatprep.subr.bf16.mxu0 0
        %1407 = vmatpush1.bf16.msra.mxu0 0
        %1408 = vmatprep.subr.bf16.mxu0 0
        %1409 = vmatpush1.bf16.msra.mxu0 0
        %1410 = vmatprep.subr.bf16.mxu0 0
        %1411 = vmatpush1.bf16.msra.mxu0 0
        %1412 = vmatprep.subr.bf16.mxu0 0
        %1413 = vmatpush1.bf16.msra.mxu0 0
        %1414 = vmatprep.subr.bf16.mxu0 0
        %1415 = vmatpush1.bf16.msra.mxu0 %v1396
        %1416 = vmatprep.subr.bf16.mxu0 0
        %1417 = vmatpush1.bf16.msra.mxu0 %v1395
        %1418 = vmatprep.subr.bf16.mxu0 0
        %1419 = vmatpush2.bf16.msra.mxu0 0
        %1420 = vmatprep.subr.bf16.mxu0 0
        %1421 = vmatpush2.bf16.msra.mxu0 0
        %1422 = vmatprep.subr.bf16.mxu0 0
        %1423 = vmatpush2.bf16.msra.mxu0 0
        %1424 = vmatprep.subr.bf16.mxu0 0
        %1425 = vmatpush2.bf16.msra.mxu0 0
        %1426 = vmatprep.subr.bf16.mxu0 0
        %1427 = vmatpush2.bf16.msra.mxu0 0
        %1428 = vmatprep.subr.bf16.mxu0 0
        %1429 = vmatpush2.bf16.msra.mxu0 0
        %1430 = vmatprep.subr.bf16.mxu0 0
        %1431 = vmatpush2.bf16.msra.mxu0 0
        %1432 = vmatprep.subr.bf16.mxu0 0
        %1433 = vmatpush2.bf16.msra.mxu0 0
        %1434 = vmatprep.mubr.bf16.mxu0 0
        %1435 = vmatmul.mubr.bf16.gmra.mxu0 %v1400
        %v1436 = vpop.f32.mrf.mxu0
        %v1437 = vadd.f32 0.0, %v1436
        %v1438 = vpop.f32.mrf.mxu0
        %v1439 = vpop.f32.mrf.mxu0
        %v1440 = vpop.f32.mrf.mxu0
        %1441 = vdwg.mxu0
        %v1446 = vunpack.c.l.b16 %v381
        %v1447 = vunpack.c.l.b16 %v382
        %v1448 = vunpack.c.l.b16 %v383
        %v1449 = vunpack.c.l.b16 %v384
        %v1450 = vpack.c.b16 %v1447, %v1446
        %v1451 = vpack.c.b16 %v1449, %v1448
        %1454 = vmatprep.subr.bf16.mxu0 0
        %1455 = vmatpush1.bf16.msra.mxu0 0
        %1456 = vmatprep.subr.bf16.mxu0 0
        %1457 = vmatpush1.bf16.msra.mxu0 0
        %1458 = vmatprep.subr.bf16.mxu0 0
        %1459 = vmatpush1.bf16.msra.mxu0 0
        %1460 = vmatprep.subr.bf16.mxu0 0
        %1461 = vmatpush1.bf16.msra.mxu0 0
        %1462 = vmatprep.subr.bf16.mxu0 0
        %1463 = vmatpush1.bf16.msra.mxu0 0
        %1464 = vmatprep.subr.bf16.mxu0 0
        %1465 = vmatpush1.bf16.msra.mxu0 0
        %1466 = vmatprep.subr.bf16.mxu0 0
        %1467 = vmatpush1.bf16.msra.mxu0 %v1451
        %1468 = vmatprep.subr.bf16.mxu0 0
        %1469 = vmatpush1.bf16.msra.mxu0 %v1450
        %1470 = vmatprep.subr.bf16.mxu0 0
        %1471 = vmatpush2.bf16.msra.mxu0 0
        %1472 = vmatprep.subr.bf16.mxu0 0
        %1473 = vmatpush2.bf16.msra.mxu0 0
        %1474 = vmatprep.subr.bf16.mxu0 0
        %1475 = vmatpush2.bf16.msra.mxu0 0
        %1476 = vmatprep.subr.bf16.mxu0 0
        %1477 = vmatpush2.bf16.msra.mxu0 0
        %1478 = vmatprep.subr.bf16.mxu0 0
        %1479 = vmatpush2.bf16.msra.mxu0 0
        %1480 = vmatprep.subr.bf16.mxu0 0
        %1481 = vmatpush2.bf16.msra.mxu0 0
        %1482 = vmatprep.subr.bf16.mxu0 0
        %1483 = vmatpush2.bf16.msra.mxu0 0
        %1484 = vmatprep.subr.bf16.mxu0 0
        %1485 = vmatpush2.bf16.msra.mxu0 0
        %1486 = vmatprep.mubr.bf16.mxu0 0
        %1487 = vmatmul.mubr.bf16.gmra.mxu0 %v1400
        %v1488 = vpop.f32.mrf.mxu0
        %v1489 = vadd.f32 0.0, %v1488
        %v1490 = vpop.f32.mrf.mxu0
        %v1491 = vpop.f32.mrf.mxu0
        %v1492 = vpop.f32.mrf.mxu0
        %1493 = vdwg.mxu0
        %v1498 = vunpack.c.l.b16 %v385
        %v1499 = vunpack.c.l.b16 %v386
        %v1500 = vunpack.c.l.b16 %v387
        %v1501 = vunpack.c.l.b16 %v388
        %v1502 = vpack.c.b16 %v1499, %v1498
        %v1503 = vpack.c.b16 %v1501, %v1500
        %1506 = vmatprep.subr.bf16.mxu0 0
        %1507 = vmatpush1.bf16.msra.mxu0 0
        %1508 = vmatprep.subr.bf16.mxu0 0
        %1509 = vmatpush1.bf16.msra.mxu0 0
        %1510 = vmatprep.subr.bf16.mxu0 0
        %1511 = vmatpush1.bf16.msra.mxu0 0
        %1512 = vmatprep.subr.bf16.mxu0 0
        %1513 = vmatpush1.bf16.msra.mxu0 0
        %1514 = vmatprep.subr.bf16.mxu0 0
        %1515 = vmatpush1.bf16.msra.mxu0 0
        %1516 = vmatprep.subr.bf16.mxu0 0
        %1517 = vmatpush1.bf16.msra.mxu0 0
        %1518 = vmatprep.subr.bf16.mxu0 0
        %1519 = vmatpush1.bf16.msra.mxu0 %v1503
        %1520 = vmatprep.subr.bf16.mxu0 0
        %1521 = vmatpush1.bf16.msra.mxu0 %v1502
        %1522 = vmatprep.subr.bf16.mxu0 0
        %1523 = vmatpush2.bf16.msra.mxu0 0
        %1524 = vmatprep.subr.bf16.mxu0 0
        %1525 = vmatpush2.bf16.msra.mxu0 0
        %1526 = vmatprep.subr.bf16.mxu0 0
        %1527 = vmatpush2.bf16.msra.mxu0 0
        %1528 = vmatprep.subr.bf16.mxu0 0
        %1529 = vmatpush2.bf16.msra.mxu0 0
        %1530 = vmatprep.subr.bf16.mxu0 0
        %1531 = vmatpush2.bf16.msra.mxu0 0
        %1532 = vmatprep.subr.bf16.mxu0 0
        %1533 = vmatpush2.bf16.msra.mxu0 0
        %1534 = vmatprep.subr.bf16.mxu0 0
        %1535 = vmatpush2.bf16.msra.mxu0 0
        %1536 = vmatprep.subr.bf16.mxu0 0
        %1537 = vmatpush2.bf16.msra.mxu0 0
        %1538 = vmatprep.mubr.bf16.mxu0 0
        %1539 = vmatmul.mubr.bf16.gmra.mxu0 %v1400
        %v1540 = vpop.f32.mrf.mxu0
        %v1541 = vadd.f32 0.0, %v1540
        %v1542 = vpop.f32.mrf.mxu0
        %v1543 = vpop.f32.mrf.mxu0
        %v1544 = vpop.f32.mrf.mxu0
        %1545 = vdwg.mxu0
        %v1546 = vmul.f32 %v1437, 0.17677669
        %v1547 = vpack.c.bf16 %v1546, %v1546
        %v1548 = vpack.c.bf16 %v1489, %v1489
        %v1549 = vpack.c.bf16 %v1541, %v1541
        %v1551 = vsel %vm417, %v1547, 0
        %v1554 = vsel %vm417, %v1548, 0
        %1556 = vmatprep.subr.bf16.mxu0 0
        %1557 = vmatpush1.bf16.xpose.msra.mxu0 0
        %1558 = vmatprep.subr.bf16.mxu0 0
        %1559 = vmatpush1.bf16.xpose.msra.mxu0 0
        %1560 = vmatprep.subr.bf16.mxu0 0
        %1561 = vmatpush1.bf16.xpose.msra.mxu0 0
        %1562 = vmatprep.subr.bf16.mxu0 0
        %1563 = vmatpush1.bf16.xpose.msra.mxu0 0
        %1564 = vmatprep.subr.bf16.mxu0 0
        %1565 = vmatpush1.bf16.xpose.msra.mxu0 0
        %1566 = vmatprep.subr.bf16.mxu0 0
        %1567 = vmatpush1.bf16.xpose.msra.mxu0 0
        %1568 = vmatprep.subr.bf16.mxu0 0
        %1569 = vmatpush1.bf16.xpose.msra.mxu0 0
        %1570 = vmatprep.subr.bf16.mxu0 0
        %1571 = vmatpush1.bf16.xpose.msra.mxu0 %v1554
        %1572 = vmatprep.subr.bf16.mxu0 0
        %1573 = vmatpush2.bf16.xpose.msra.mxu0 0
        %1574 = vmatprep.subr.bf16.mxu0 0
        %1575 = vmatpush2.bf16.xpose.msra.mxu0 0
        %1576 = vmatprep.subr.bf16.mxu0 0
        %1577 = vmatpush2.bf16.xpose.msra.mxu0 0
        %1578 = vmatprep.subr.bf16.mxu0 0
        %1579 = vmatpush2.bf16.xpose.msra.mxu0 0
        %1580 = vmatprep.subr.bf16.mxu0 0
        %1581 = vmatpush2.bf16.xpose.msra.mxu0 0
        %1582 = vmatprep.subr.bf16.mxu0 0
        %1583 = vmatpush2.bf16.xpose.msra.mxu0 0
        %1584 = vmatprep.subr.bf16.mxu0 0
        %1585 = vmatpush2.bf16.xpose.msra.mxu0 0
        %1586 = vmatprep.subr.bf16.mxu0 0
        %1587 = vmatpush2.bf16.xpose.msra.mxu0 0
        %1588 = vmatprep.mubr.bf16.mxu0 0
        %1589 = vmatmul.mubr.bf16.gmra.mxu0 %v1551
        %v1590 = vpop.f32.mrf.mxu0
        %v1591 = vadd.f32 0.0, %v1590
        %v1592 = vpop.f32.mrf.mxu0
        %v1593 = vpop.f32.mrf.mxu0
        %v1594 = vpop.f32.mrf.mxu0
        %1595 = vdwg.mxu0
        %v1596 = vsel %vm615, %v1591, -inf
        %1597 = vmax.xlane.f32.xlu0 %v1596
        %v1598 = vpop.xlane.xlu0 %1597
        %v1599 = vsub.f32 %v1591, %v1598
        %v1600 = vmul.f32 %v1599, 1.442695
        %v1601 = vpow.pop %v1600
        %v1602 = vsel %vm615, %v1601, 0.0
        %1603 = vadd.xlane.f32.xlu0 %v1602
        %v1604 = vpop.xlane.xlu0 %1603
        %v1605 = vrcp.pop %v1604
        %v1606 = vmul.f32 %v1601, %v1605
        %v1607 = vpack.c.bf16 %v1606, %v1606
        %v1609 = vsel %vm615, %v1607, 0
        %v1612 = vsel %vm631, %v1549, 0
        %1614 = vmatprep.subr.bf16.mxu0 0
        %1615 = vmatpush1.bf16.msra.mxu0 0
        %1616 = vmatprep.subr.bf16.mxu0 0
        %1617 = vmatpush1.bf16.msra.mxu0 0
        %1618 = vmatprep.subr.bf16.mxu0 0
        %1619 = vmatpush1.bf16.msra.mxu0 0
        %1620 = vmatprep.subr.bf16.mxu0 0
        %1621 = vmatpush1.bf16.msra.mxu0 0
        %1622 = vmatprep.subr.bf16.mxu0 0
        %1623 = vmatpush1.bf16.msra.mxu0 0
        %1624 = vmatprep.subr.bf16.mxu0 0
        %1625 = vmatpush1.bf16.msra.mxu0 0
        %1626 = vmatprep.subr.bf16.mxu0 0
        %1627 = vmatpush1.bf16.msra.mxu0 0
        %1628 = vmatprep.subr.bf16.mxu0 0
        %1629 = vmatpush1.bf16.msra.mxu0 %v1612
        %1630 = vmatprep.subr.bf16.mxu0 0
        %1631 = vmatpush2.bf16.msra.mxu0 0
        %1632 = vmatprep.subr.bf16.mxu0 0
        %1633 = vmatpush2.bf16.msra.mxu0 0
        %1634 = vmatprep.subr.bf16.mxu0 0
        %1635 = vmatpush2.bf16.msra.mxu0 0
        %1636 = vmatprep.subr.bf16.mxu0 0
        %1637 = vmatpush2.bf16.msra.mxu0 0
        %1638 = vmatprep.subr.bf16.mxu0 0
        %1639 = vmatpush2.bf16.msra.mxu0 0
        %1640 = vmatprep.subr.bf16.mxu0 0
        %1641 = vmatpush2.bf16.msra.mxu0 0
        %1642 = vmatprep.subr.bf16.mxu0 0
        %1643 = vmatpush2.bf16.msra.mxu0 0
        %1644 = vmatprep.subr.bf16.mxu0 0
        %1645 = vmatpush2.bf16.msra.mxu0 0
        %1646 = vmatprep.mubr.bf16.mxu0 0
        %1647 = vmatmul.mubr.bf16.gmra.mxu0 %v1609
        %v1648 = vpop.f32.mrf.mxu0
        %v1649 = vadd.f32 0.0, %v1648
        %v1650 = vpop.f32.mrf.mxu0
        %v1651 = vpop.f32.mrf.mxu0
        %v1652 = vpop.f32.mrf.mxu0
        %1653 = vdwg.mxu0
        %v1654 = vadd.f32 %v328, %v1649
        %v1655 = vsel %vm417, %v1654, 0.0
        %1656 = vadd.xlane.f32.xlu0 %v1655
        %v1657 = vpop.xlane.xlu0 %1656
        %v1658 = vmul.f32 %v1657, %v679
        %v1659 = vsub.f32 %v1654, %v1658
        %v1660 = vmul.f32 %v1659, %v1659
        %v1661 = vsel %vm417, %v1660, 0.0
        %1662 = vadd.xlane.f32.xlu0 %v1661
        %v1663 = vpop.xlane.xlu0 %1662
        %v1664 = vmul.f32 %v1663, %v679
        %v1665 = vadd.f32 %v1664, 1e-05
        %v1666 = vrsqrt.pop %v1665
        %v1667 = vmul.f32 %v1659, %v1666
        %v1668 = vlaneseq
        %v1669 = vshrl.u32 %v1668, 7
        %v1670 = vsub.s32 0, %v1669
        %v1671 = vrot.slane %v403, %v1670
        %v1672 = vmul.f32 %v1667, %v1671
        %v1673 = vlaneseq
        %v1674 = vshrl.u32 %v1673, 7
        %v1675 = vsub.s32 1, %v1674
        %v1676 = vrot.slane %v403, %v1675
        %v1677 = vadd.f32 %v1672, %v1676
        %v1678 = vpack.c.bf16 %v1677, %v1677
        %v1683 = vunpack.c.l.b16 %v389
        %v1684 = vunpack.c.l.b16 %v390
        %v1685 = vunpack.c.l.b16 %v391
        %v1686 = vunpack.c.l.b16 %v392
        %v1687 = vpack.c.b16 %v1684, %v1683
        %v1688 = vpack.c.b16 %v1686, %v1685
        %v1692 = vsel %vm417, %v1678, 0
        %1694 = vmatprep.subr.bf16.mxu0 0
        %1695 = vmatpush1.bf16.msra.mxu0 0
        %1696 = vmatprep.subr.bf16.mxu0 0
        %1697 = vmatpush1.bf16.msra.mxu0 0
        %1698 = vmatprep.subr.bf16.mxu0 0
        %1699 = vmatpush1.bf16.msra.mxu0 0
        %1700 = vmatprep.subr.bf16.mxu0 0
        %1701 = vmatpush1.bf16.msra.mxu0 0
        %1702 = vmatprep.subr.bf16.mxu0 0
        %1703 = vmatpush1.bf16.msra.mxu0 0
        %1704 = vmatprep.subr.bf16.mxu0 0
        %1705 = vmatpush1.bf16.msra.mxu0 0
        %1706 = vmatprep.subr.bf16.mxu0 0
        %1707 = vmatpush1.bf16.msra.mxu0 %v1688
        %1708 = vmatprep.subr.bf16.mxu0 0
        %1709 = vmatpush1.bf16.msra.mxu0 %v1687
        %1710 = vmatprep.subr.bf16.mxu0 0
        %1711 = vmatpush2.bf16.msra.mxu0 0
        %1712 = vmatprep.subr.bf16.mxu0 0
        %1713 = vmatpush2.bf16.msra.mxu0 0
        %1714 = vmatprep.subr.bf16.mxu0 0
        %1715 = vmatpush2.bf16.msra.mxu0 0
        %1716 = vmatprep.subr.bf16.mxu0 0
        %1717 = vmatpush2.bf16.msra.mxu0 0
        %1718 = vmatprep.subr.bf16.mxu0 0
        %1719 = vmatpush2.bf16.msra.mxu0 0
        %1720 = vmatprep.subr.bf16.mxu0 0
        %1721 = vmatpush2.bf16.msra.mxu0 0
        %1722 = vmatprep.subr.bf16.mxu0 0
        %1723 = vmatpush2.bf16.msra.mxu0 0
        %1724 = vmatprep.subr.bf16.mxu0 0
        %1725 = vmatpush2.bf16.msra.mxu0 0
        %1726 = vmatprep.mubr.bf16.mxu0 0
        %1727 = vmatmul.mubr.bf16.gmra.mxu0 %v1692
        %v1728 = vpop.f32.mrf.mxu0
        %v1729 = vadd.f32 0.0, %v1728
        %v1730 = vpop.f32.mrf.mxu0
        %v1731 = vpop.f32.mrf.mxu0
        %v1732 = vpop.f32.mrf.mxu0
        %1733 = vdwg.mxu0
        %v1734 = vmax.f32 %v1729, 0.0
        %v1735 = vpack.c.bf16 %v1734, %v1734
        %v1740 = vunpack.c.l.b16 %v393
        %v1741 = vunpack.c.l.b16 %v394
        %v1742 = vunpack.c.l.b16 %v395
        %v1743 = vunpack.c.l.b16 %v396
        %v1744 = vpack.c.b16 %v1741, %v1740
        %v1745 = vpack.c.b16 %v1743, %v1742
        %v1749 = vsel %vm417, %v1735, 0
        %1751 = vmatprep.subr.bf16.mxu0 0
        %1752 = vmatpush1.bf16.msra.mxu0 0
        %1753 = vmatprep.subr.bf16.mxu0 0
        %1754 = vmatpush1.bf16.msra.mxu0 0
        %1755 = vmatprep.subr.bf16.mxu0 0
        %1756 = vmatpush1.bf16.msra.mxu0 0
        %1757 = vmatprep.subr.bf16.mxu0 0
        %1758 = vmatpush1.bf16.msra.mxu0 0
        %1759 = vmatprep.subr.bf16.mxu0 0
        %1760 = vmatpush1.bf16.msra.mxu0 0
        %1761 = vmatprep.subr.bf16.mxu0 0
        %1762 = vmatpush1.bf16.msra.mxu0 0
        %1763 = vmatprep.subr.bf16.mxu0 0
        %1764 = vmatpush1.bf16.msra.mxu0 %v1745
        %1765 = vmatprep.subr.bf16.mxu0 0
        %1766 = vmatpush1.bf16.msra.mxu0 %v1744
        %1767 = vmatprep.subr.bf16.mxu0 0
        %1768 = vmatpush2.bf16.msra.mxu0 0
        %1769 = vmatprep.subr.bf16.mxu0 0
        %1770 = vmatpush2.bf16.msra.mxu0 0
        %1771 = vmatprep.subr.bf16.mxu0 0
        %1772 = vmatpush2.bf16.msra.mxu0 0
        %1773 = vmatprep.subr.bf16.mxu0 0
        %1774 = vmatpush2.bf16.msra.mxu0 0
        %1775 = vmatprep.subr.bf16.mxu0 0
        %1776 = vmatpush2.bf16.msra.mxu0 0
        %1777 = vmatprep.subr.bf16.mxu0 0
        %1778 = vmatpush2.bf16.msra.mxu0 0
        %1779 = vmatprep.subr.bf16.mxu0 0
        %1780 = vmatpush2.bf16.msra.mxu0 0
        %1781 = vmatprep.subr.bf16.mxu0 0
        %1782 = vmatpush2.bf16.msra.mxu0 0
        %1783 = vmatprep.mubr.bf16.mxu0 0
        %1784 = vmatmul.mubr.bf16.gmra.mxu0 %v1749
        %v1785 = vpop.f32.mrf.mxu0
        %v1786 = vadd.f32 0.0, %v1785
        %v1787 = vpop.f32.mrf.mxu0
        %v1788 = vpop.f32.mrf.mxu0
        %v1789 = vpop.f32.mrf.mxu0
        %1790 = vdwg.mxu0
        %v1791 = vadd.f32 %v1677, %v1786
        %v1792 = vsel %vm417, %v1791, 0.0
        %1793 = vadd.xlane.f32.xlu0 %v1792
        %v1794 = vpop.xlane.xlu0 %1793
        %v1795 = vmul.f32 %v1794, %v679
        %v1796 = vsub.f32 %v1791, %v1795
        %v1797 = vmul.f32 %v1796, %v1796
        %v1798 = vsel %vm417, %v1797, 0.0
        %1799 = vadd.xlane.f32.xlu0 %v1798
        %v1800 = vpop.xlane.xlu0 %1799
        %v1801 = vmul.f32 %v1800, %v679
        %v1802 = vadd.f32 %v1801, 1e-05
        %v1803 = vrsqrt.pop %v1802
        %v1804 = vmul.f32 %v1796, %v1803
        %v1805 = vlaneseq
        %v1806 = vshrl.u32 %v1805, 7
        %v1807 = vsub.s32 2, %v1806
        %v1808 = vrot.slane %v403, %v1807
        %v1809 = vmul.f32 %v1804, %v1808
        %v1810 = vlaneseq
        %v1811 = vshrl.u32 %v1810, 7
        %v1812 = vsub.s32 3, %v1811
        %v1813 = vrot.slane %v403, %v1812
        %v1814 = vadd.f32 %v1809, %v1813
        %v1815 = vpack.c.bf16 %v1814, %v1814
        %v1820 = vunpack.c.l.b16 %v397
        %v1821 = vunpack.c.l.b16 %v398
        %v1822 = vunpack.c.l.b16 %v399
        %v1823 = vunpack.c.l.b16 %v400
        %v1824 = vpack.c.b16 %v1821, %v1820
        %v1825 = vpack.c.b16 %v1823, %v1822
        %v1829 = vsel %vm417, %v1815, 0
        %1831 = vmatprep.subr.bf16.mxu0 0
        %1832 = vmatpush1.bf16.msra.mxu0 0
        %1833 = vmatprep.subr.bf16.mxu0 0
        %1834 = vmatpush1.bf16.msra.mxu0 0
        %1835 = vmatprep.subr.bf16.mxu0 0
        %1836 = vmatpush1.bf16.msra.mxu0 0
        %1837 = vmatprep.subr.bf16.mxu0 0
        %1838 = vmatpush1.bf16.msra.mxu0 0
        %1839 = vmatprep.subr.bf16.mxu0 0
        %1840 = vmatpush1.bf16.msra.mxu0 0
        %1841 = vmatprep.subr.bf16.mxu0 0
        %1842 = vmatpush1.bf16.msra.mxu0 0
        %1843 = vmatprep.subr.bf16.mxu0 0
        %1844 = vmatpush1.bf16.msra.mxu0 %v1825
        %1845 = vmatprep.subr.bf16.mxu0 0
        %1846 = vmatpush1.bf16.msra.mxu0 %v1824
        %1847 = vmatprep.subr.bf16.mxu0 0
        %1848 = vmatpush2.bf16.msra.mxu0 0
        %1849 = vmatprep.subr.bf16.mxu0 0
        %1850 = vmatpush2.bf16.msra.mxu0 0
        %1851 = vmatprep.subr.bf16.mxu0 0
        %1852 = vmatpush2.bf16.msra.mxu0 0
        %1853 = vmatprep.subr.bf16.mxu0 0
        %1854 = vmatpush2.bf16.msra.mxu0 0
        %1855 = vmatprep.subr.bf16.mxu0 0
        %1856 = vmatpush2.bf16.msra.mxu0 0
        %1857 = vmatprep.subr.bf16.mxu0 0
        %1858 = vmatpush2.bf16.msra.mxu0 0
        %1859 = vmatprep.subr.bf16.mxu0 0
        %1860 = vmatpush2.bf16.msra.mxu0 0
        %1861 = vmatprep.subr.bf16.mxu0 0
        %1862 = vmatpush2.bf16.msra.mxu0 0
        %1863 = vmatprep.mubr.bf16.mxu0 0
        %1864 = vmatmul.mubr.bf16.gmra.mxu0 %v1829
        %v1865 = vpop.f32.mrf.mxu0
        %v1866 = vadd.f32 0.0, %v1865
        %v1867 = vpop.f32.mrf.mxu0
        %v1868 = vpop.f32.mrf.mxu0
        %v1869 = vpop.f32.mrf.mxu0
        %1870 = vdwg.mxu0
        %v1871 = vmul.f32 %v1814, 0.3
        %v1872 = vadd.f32 %v1383, %v1871
        %v1873 = vmul.f32 %v1866, 0.3
        %v1874 = vadd.f32 %v1385, %v1873
        %1875 = vst.msk [vmem:[%s317] sm:$0xff] %vm417, %v1874
        %v1876 = vpack.c.bf16 %v1872, %v1872
        %v1877 = vld [vmem:[#allocation8] sm:$0xf]
        %v1878 = vld [vmem:[#allocation8 + $0x4] sm:$0xf]
        %v1879 = vld [vmem:[#allocation8 + $0x8] sm:$0xf]
        %v1880 = vld [vmem:[#allocation8 + $0xc] sm:$0xf]
        %v1881 = vld [vmem:[%s4] sm:$0x1]
        %v1883 = vlaneseq
        %v1884 = vshrl.u32 %v1883, 7
        %v1885 = vsub.s32 0, %v1884
        %v1886 = vrot.slane %v1881, %v1885
        %v1892 = vunpack.c.l.b16 %v1877
        %v1893 = vunpack.c.l.b16 %v1878
        %v1894 = vunpack.c.l.b16 %v1879
        %v1895 = vunpack.c.l.b16 %v1880
        %v1896 = vpack.c.b16 %v1893, %v1892
        %v1897 = vpack.c.b16 %v1895, %v1894
        %v1901 = vsel %vm417, %v1876, 0
        %1903 = vmatprep.subr.bf16.mxu0 0
        %1904 = vmatpush1.bf16.msra.mxu0 0
        %1905 = vmatprep.subr.bf16.mxu0 0
        %1906 = vmatpush1.bf16.msra.mxu0 0
        %1907 = vmatprep.subr.bf16.mxu0 0
        %1908 = vmatpush1.bf16.msra.mxu0 0
        %1909 = vmatprep.subr.bf16.mxu0 0
        %1910 = vmatpush1.bf16.msra.mxu0 0
        %1911 = vmatprep.subr.bf16.mxu0 0
        %1912 = vmatpush1.bf16.msra.mxu0 0
        %1913 = vmatprep.subr.bf16.mxu0 0
        %1914 = vmatpush1.bf16.msra.mxu0 0
        %1915 = vmatprep.subr.bf16.mxu0 0
        %1916 = vmatpush1.bf16.msra.mxu0 %v1897
        %1917 = vmatprep.subr.bf16.mxu0 0
        %1918 = vmatpush1.bf16.msra.mxu0 %v1896
        %1919 = vmatprep.subr.bf16.mxu0 0
        %1920 = vmatpush2.bf16.msra.mxu0 0
        %1921 = vmatprep.subr.bf16.mxu0 0
        %1922 = vmatpush2.bf16.msra.mxu0 0
        %1923 = vmatprep.subr.bf16.mxu0 0
        %1924 = vmatpush2.bf16.msra.mxu0 0
        %1925 = vmatprep.subr.bf16.mxu0 0
        %1926 = vmatpush2.bf16.msra.mxu0 0
        %1927 = vmatprep.subr.bf16.mxu0 0
        %1928 = vmatpush2.bf16.msra.mxu0 0
        %1929 = vmatprep.subr.bf16.mxu0 0
        %1930 = vmatpush2.bf16.msra.mxu0 0
        %1931 = vmatprep.subr.bf16.mxu0 0
        %1932 = vmatpush2.bf16.msra.mxu0 0
        %1933 = vmatprep.subr.bf16.mxu0 0
        %1934 = vmatpush2.bf16.msra.mxu0 0
        %1935 = vmatprep.mubr.bf16.mxu0 0
        %1936 = vmatmul.mubr.bf16.gmra.mxu0 %v1901
        %v1937 = vpop.f32.mrf.mxu0
        %v1938 = vadd.f32 %v1886, %v1937
        %v1939 = vpop.f32.mrf.mxu0
        %v1940 = vpop.f32.mrf.mxu0
        %v1941 = vpop.f32.mrf.mxu0
        %1942 = vdwg.mxu0
        %v1943 = vpack.c.bf16 %v1938, %v1938
        %1944 = vst [vmem:[%s324] sm:$0xf] %v1943
        %s1945 = sand.u32 %s147, 1
        %s1946 = scalar_lea.sflag [#allocation4], %s1945
        %s1947 = sand.u32 %s147, 1
        %s1948 = smul.addr %s1947, 8
        %s1949 = scalar_lea.vmem [#allocation10], %s1948
        %s1950 = sand.u32 %s173, 1
        %s1951 = scalar_lea.sflag [#allocation12], %s1950
        %s1952 = sand.u32 %s173, 1
        %s1953 = smul.addr %s1952, 4
        %s1954 = scalar_lea.vmem [#allocation11], %s1953
        // Predicated region
        $region57: #{tpu_custom_call.1} parent=39 // pred_check
          %p1955 = pneg %p157
        $region58: #{tpu_custom_call.1} parent=39 // pred_check_branch
          %1957 = sbr.rel (%p1955) target = $region60
        $region59: #{tpu_custom_call.1} parent=39 // pred_region
          %s1959 = ssub.s32 128, 128
          %1960 = vsyncadd %s1946, %s1959
          %s1961 = smul.addr %s29, 128
          %s1962 = scalar_lea.hbm %s5, %s1961
          %s1964 = sshll.u32 %s1949, 4
          %s1965 = int_to_ptr.vmem [resolvable:$true] %s1964
          %1967 = dma.vmem_to_hbm [thread:$0]  %s1965, 128, %s1962, %s1946
        $region60: #{tpu_custom_call.1} parent=39 // pred_fallthru
          _
        // Predicated region
        $region61: #{tpu_custom_call.1} parent=39 // pred_check
          %p1968 = pneg %p183
        $region62: #{tpu_custom_call.1} parent=39 // pred_check_branch
          %1970 = sbr.rel (%p1968) target = $region64
        $region63: #{tpu_custom_call.1} parent=39 // pred_region
          %s1972 = ssub.s32 64, 64
          %1973 = vsyncadd %s1951, %s1972
          %s1974 = smul.addr %s29, 64
          %s1975 = scalar_lea.hbm %s6, %s1974
          %s1977 = sshll.u32 %s1954, 4
          %s1978 = int_to_ptr.vmem [resolvable:$true] %s1977
          %1980 = dma.vmem_to_hbm [thread:$0]  %s1978, 64, %s1975, %s1951
        $region64: #{tpu_custom_call.1} parent=39 // pred_fallthru
          _
      $region40: #{tpu_custom_call.1} parent=5 // pred_fallthru
        _
      %p1981 = scmp.le.s32.totalorder 2, %s24
      // Predicated region
      $region65: #{tpu_custom_call.1} parent=5 // pred_check
        %p1982 = pneg %p1981
      $region66: #{tpu_custom_call.1} parent=5 // pred_check_branch
        %1984 = sbr.rel (%p1982) target = $region68
      $region67: #{tpu_custom_call.1} parent=5 // pred_region
        %s1985 = ssub.s32 %s24, 2
        // Predicated region
        $region69: #{tpu_custom_call.1} parent=67 // pred_check
          %p1986 = pneg %p163
        $region70: #{tpu_custom_call.1} parent=67 // pred_check_branch
          %1988 = sbr.rel (%p1986) target = $region72
        $region71: #{tpu_custom_call.1} parent=67 // pred_region
          %s1989 = sand.u32 %s148, 1
          %s1990 = scalar_lea.sflag [#allocation4], %s1989
          %s1991 = sand.u32 %s148, 1
          %s1992 = smul.addr %s1991, 8
          %s1993 = scalar_lea.vmem [#allocation10], %s1992
          %1994 = dma.done %s1990, 128
        $region72: #{tpu_custom_call.1} parent=67 // pred_fallthru
          _
        // Predicated region
        $region73: #{tpu_custom_call.1} parent=67 // pred_check
          %p1995 = pneg %p189
        $region74: #{tpu_custom_call.1} parent=67 // pred_check_branch
          %1997 = sbr.rel (%p1995) target = $region76
        $region75: #{tpu_custom_call.1} parent=67 // pred_region
          %s1998 = sand.u32 %s174, 1
          %s1999 = scalar_lea.sflag [#allocation12], %s1998
          %s2000 = sand.u32 %s174, 1
          %s2001 = smul.addr %s2000, 4
          %s2002 = scalar_lea.vmem [#allocation11], %s2001
          %2003 = dma.done %s1999, 64
        $region76: #{tpu_custom_call.1} parent=67 // pred_fallthru
          _
      $region68: #{tpu_custom_call.1} parent=5 // pred_fallthru
        _
    $region6: #{tpu_custom_call.1} parent=1 // loop_footer
      %s28 = sadd.s32 1, %s24
    $region7: #{tpu_custom_call.1} parent=1 // loop_footer_branch
      %23 = sbr.rel target = $region3
    $region8: #{tpu_custom_call.1} parent=1 // loop_exit
      _
    %2004 = vsyncpa [#allocation3], 1
    %s2005 = scalar_lea.sflag [#allocation3], 1
    %2006 = vsyncpa %s2005, 1
    %2007 = vsyncpa [#allocation6], 1
    %2008 = vsyncpa [#allocation9], 1
    %2009 = vsyncpa [#allocation4], 1
    %s2010 = scalar_lea.sflag [#allocation4], 1
    %2011 = vsyncpa %s2010, 1
    %2012 = vsyncpa [#allocation12], 1
    %s2013 = scalar_lea.sflag [#allocation12], 1
    %2014 = vsyncpa %s2013, 1

</llo_original>
